<compile_context>
chip_gen: v6e
topology: v6e:2x2x1
jax: 0.10.0
libtpu: 0.0.40
codegen_flags: <defaults>
</compile_context>

<pallas_src>
import jax
import jax.numpy as jnp
from jax.experimental import pallas as pl
from jax.experimental.pallas import tpu as pltpu


# ----------------------------------------------------------------------------
# Fused BiLSTM (packed semantics) + deferred masked Linear classifier — 1 kernel.
# ----------------------------------------------------------------------------
def _make_fused_kernel(S, BP, E, H, OP, mm_dtype):
    G = 4 * H

    def kernel(x_ref, amsk_ref, hc0_ref, wih_ref, whh_ref, b_ref,
               wc_ref, bc_ref, out_ref, gin_ref, acc_ref):
        # ---- hoisted input projection: ONE GEMM over all steps & both dirs,
        #      parked in a VMEM scratch (bounds vreg pressure across the loop) ----
        gin_ref[...] = (jnp.dot(x_ref[...], wih_ref[...],
                                preferred_element_type=jnp.float32)
                        + b_ref[...])                                  # (S*BP, 8H)

        whh = whh_ref[...]                 # (2H, 8H) block-diagonal, gate-permuted

        # Initial states (padded to BP): rows = [h_f, h_b, c_f, c_b].
        h_f = hc0_ref[0]
        h_b = hc0_ref[1]
        c_f = hc0_ref[2]
        c_b = hc0_ref[3]

        def cell(gates, c_prev):
            # Gate columns pre-permuted to (i, f, o | g): sigmoid on 3H, tanh on H.
            sig = jax.nn.sigmoid(gates[:, 0:3 * H])
            g_g = jnp.tanh(gates[:, 3 * H:4 * H])
            i_g = sig[:, 0:H]
            f_g = sig[:, H:2 * H]
            o_g = sig[:, 2 * H:3 * H]
            c_new = f_g * c_prev + i_g * g_g
            h_new = o_g * jnp.tanh(c_new)
            return h_new, c_new

        # S small & static -> fully unrolled time loop, all slice starts static.
        for t in range(S):
            tb = S - 1 - t

            # ONE fused recurrent matmul covering both directions this step.
            h_cat = jnp.concatenate([h_f, h_b], axis=1).astype(mm_dtype)   # (BP, 2H)
            rec = jnp.dot(h_cat, whh, preferred_element_type=jnp.float32)  # (BP, 8H)

            # ---------------- forward direction, time t ----------------
            am_f = amsk_ref[t]                      # (BP, 2): [active, active*mask]
            a_f = am_f[:, 0:1]
            gates_f = gin_ref[pl.ds(t * BP, BP), pl.ds(0, G)] + rec[:, 0:G]
            hf_new, cf_new = cell(gates_f, c_f)
            on_f = a_f > 0.0
            h_f = jnp.where(on_f, hf_new, h_f)      # freeze state past length
            c_f = jnp.where(on_f, cf_new, c_f)
            acc_ref[pl.ds(t * BP, BP), pl.ds(0, H)] = hf_new * am_f[:, 1:2]

            # ---------------- backward direction, time tb ----------------
            am_b = amsk_ref[tb]
            a_b = am_b[:, 0:1]
            gates_b = gin_ref[pl.ds(tb * BP, BP), pl.ds(G, G)] + rec[:, G:2 * G]
            hb_new, cb_new = cell(gates_b, c_b)
            on_b = a_b > 0.0
            h_b = jnp.where(on_b, hb_new, h_b)
            c_b = jnp.where(on_b, cb_new, c_b)
            acc_ref[pl.ds(tb * BP, BP), pl.ds(H, H)] = hb_new * am_b[:, 1:2]

        # ---- deferred classifier: one GEMM + bias, write-once lane-dense output ----
        out_ref[...] = (jnp.dot(acc_ref[...].astype(mm_dtype), wc_ref[...],
                                preferred_element_type=jnp.float32)
                        + bc_ref[...])

    return kernel


# ----------------------------------------------------------------------------
# Full EventExtractor forward (Pallas hot path + tiny JAX glue).
# ----------------------------------------------------------------------------
def event_extractor_forward(params, sents, lengths, masks, hidden_init,
                            matmul_dtype=jnp.float32):
    """sents: (B,S) int32; lengths: (B,) int32 (desc-sorted, max == S, like
       pack_padded_sequence); masks: (B,S) float32.
       Returns (B*S, output_size) float32, same as EventExtractor.forward.
       matmul_dtype=jnp.bfloat16 is the recommended mode on v6e/v7x (MXU-native);
       state / elementwise / accumulation stay f32 either way."""
    B, S = sents.shape
    E = params["emb_table"].shape[1]
    H = params["whh_f_t"].shape[0]
    O = params["wc_t"].shape[1]
    OP = ((O + 127) // 128) * 128          # lane-dense classifier output width
    BP = ((B + 7) // 8) * 8                # f32 sublane-multiple batch padding
    G = 4 * H

    # Gate permutation: PyTorch (i, f, g, o) -> (i, f, o, g).
    perm = jnp.concatenate([jnp.arange(0, 2 * H),
                            jnp.arange(3 * H, 4 * H),
                            jnp.arange(2 * H, 3 * H)])

    # Embedding gather + Dropout(eval)=identity; pad batch; time-major flatten.
    emb = params["emb_table"][sents]                                    # (B, S, E)
    emb_p = jnp.pad(emb, ((0, BP - B), (0, 0), (0, 0)))
    x2d = jnp.transpose(emb_p, (1, 0, 2)).reshape(S * BP, E).astype(matmul_dtype)

    # Per-step activity (packed-sequence semantics) + module mask, coalesced.
    len_p = jnp.pad(lengths.astype(jnp.int32), (0, BP - B))
    msk_p = jnp.pad(masks.astype(jnp.float32), ((0, BP - B), (0, 0)))
    act_tm = (jnp.arange(S, dtype=jnp.int32)[:, None]
              < len_p[None, :]).astype(jnp.float32)                     # (S, BP)
    msk_tm = jnp.transpose(msk_p, (1, 0))                               # (S, BP)
    amsk = jnp.stack([act_tm, act_tm * msk_tm], axis=-1)                # (S, BP, 2)

    # Initial states, padded and stacked: [h_f, h_b, c_f, c_b].
    h0_p = jnp.pad(hidden_init["h0"], ((0, 0), (0, BP - B), (0, 0)))
    c0_p = jnp.pad(hidden_init["c0"], ((0, 0), (0, BP - B), (0, 0)))
    hc0 = jnp.concatenate([h0_p, c0_p], axis=0)                         # (4, BP, H)

    # Fused / permuted / padded weights.
    wih_cat = jnp.concatenate([params["wih_f_t"][:, perm],
                               params["wih_b_t"][:, perm]],
                              axis=1).astype(matmul_dtype)              # (E, 8H)
    whh_blk = jnp.zeros((2 * H, 8 * H), jnp.float32)
    whh_blk = whh_blk.at[0:H, 0:G].set(params["whh_f_t"][:, perm])
    whh_blk = whh_blk.at[H:2 * H, G:2 * G].set(params["whh_b_t"][:, perm])
    whh_blk = whh_blk.astype(matmul_dtype)                              # (2H, 8H)
    b_cat = jnp.concatenate([params["b_f"][:, perm],
                             params["b_b"][:, perm]], axis=1)           # (1, 8H) f32
    wc = jnp.pad(params["wc_t"], ((0, 0), (0, OP - O))).astype(matmul_dtype)  # (2H,OP)
    bc = jnp.pad(params["bc"], ((0, 0), (0, OP - O)))                   # (1, OP) f32

    vmem = pl.BlockSpec(memory_space=pltpu.MemorySpace.VMEM)
    out2d = pl.pallas_call(
        _make_fused_kernel(S, BP, E, H, OP, matmul_dtype),
        out_shape=jax.ShapeDtypeStruct((S * BP, OP), jnp.float32),
        in_specs=[vmem] * 8,
        out_specs=vmem,
        scratch_shapes=[pltpu.VMEM((S * BP, 8 * H), jnp.float32),   # input gates
                        pltpu.VMEM((S * BP, 2 * H), jnp.float32)],  # masked hiddens
    )(x2d, amsk, hc0, wih_cat, whh_blk, b_cat, wc, bc)

    # Slice OP padding BEFORE the transpose, drop padded batch rows, then reorder.
    out = out2d[:, :O].reshape(S, BP, O)[:, :B, :]
    return jnp.transpose(out, (1, 0, 2)).reshape(B * S, O)


# ----------------------------------------------------------------------------
# Pure-JAX reference (mirrors PyTorch packed BiLSTM + mask + Linear semantics).
# ----------------------------------------------------------------------------
def _ref_dir(x, lengths, h0, c0, wih_t, whh_t, b, reverse):
    B, S, _ = x.shape
    H = h0.shape[1]
    h, c = h0, c0
    outs = [None] * S
    order = range(S - 1, -1, -1) if reverse else range(S)
    for t in order:
        gates = x[:, t, :] @ wih_t + h @ whh_t + b
        i_g = jax.nn.sigmoid(gates[:, :H])
        f_g = jax.nn.sigmoid(gates[:, H:2 * H])
        g_g = jnp.tanh(gates[:, 2 * H:3 * H])
        o_g = jax.nn.sigmoid(gates[:, 3 * H:])
        c_new = f_g * c + i_g * g_g
        h_new = o_g * jnp.tanh(c_new)
        active = (lengths[:, None] > t)
        h = jnp.where(active, h_new, h)
        c = jnp.where(active, c_new, c)
        outs[t] = jnp.where(active, h_new, 0.0)
    return jnp.stack(outs, axis=1)   # (B, S, H)


def reference_forward(params, sents, lengths, masks, hidden_init):
    B, S = sents.shape
    emb = params["emb_table"][sents]
    out_f = _ref_dir(emb, lengths, hidden_init["h0"][0], hidden_init["c0"][0],
                     params["wih_f_t"], params["whh_f_t"], params["b_f"], False)
    out_b = _ref_dir(emb, lengths, hidden_init["h0"][1], hidden_init["c0"][1],
                     params["wih_b_t"], params["whh_b_t"], params["b_b"], True)
    rep = jnp.concatenate([out_f, out_b], axis=-1).reshape(B * S, -1)
    rep = rep * masks.reshape(B * S, 1)
    return rep @ params["wc_t"] + params["bc"]


# ----------------------------------------------------------------------------
if __name__ == "__main__":
    # small shapes: batch=2, seq=8, vocab=50, emb=32, hidden=32, output=10
    B, S = 2, 8
    VOCAB, E, H, O = 50, 32, 32, 10

    key = jax.random.PRNGKey(0)
    keys = jax.random.split(key, 16)

    def uni(k, shape, scale):
        return jax.random.uniform(k, shape, jnp.float32, -scale, scale)

    k_init = 1.0 / jnp.sqrt(H)
    emb_table = 0.5 * jax.random.normal(keys[0], (VOCAB, E), jnp.float32)
    emb_table = emb_table.at[0].set(0.0)    # padding_idx=0

    params = {
        "emb_table": emb_table,
        # forward-direction LSTM weights (stored pre-transposed: (E,4H)/(H,4H))
        "wih_f_t": uni(keys[1], (4 * H, E), k_init).T,
        "whh_f_t": uni(keys[2], (4 * H, H), k_init).T,
        "b_f": (uni(keys[3], (4 * H,), k_init) + uni(keys[4], (4 * H,), k_init)).reshape(1, 4 * H),
        # backward-direction LSTM weights
        "wih_b_t": uni(keys[5], (4 * H, E), k_init).T,
        "whh_b_t": uni(keys[6], (4 * H, H), k_init).T,
        "b_b": (uni(keys[7], (4 * H,), k_init) + uni(keys[8], (4 * H,), k_init)).reshape(1, 4 * H),
        # classifier (Linear 2H -> O), stored pre-transposed
        "wc_t": uni(keys[9], (O, 2 * H), 1.0 / jnp.sqrt(2 * H)).T,
        "bc": uni(keys[10], (O,), 1.0 / jnp.sqrt(2 * H)).reshape(1, O),
    }

    # BiLSTM.init_hidden -> torch.randn(2, B, H); deterministic here via PRNG.
    hidden_init = {
        "h0": jax.random.normal(keys[11], (2, B, H), jnp.float32),
        "c0": jax.random.normal(keys[12], (2, B, H), jnp.float32),
    }

    # inputs: padded token ids, descending lengths (max length == S), masks
    lengths = jnp.array([S, 5], dtype=jnp.int32)
    assert int(lengths.max()) == S and bool(jnp.all(lengths[:-1] >= lengths[1:]))
    masks = (jnp.arange(S)[None, :] < lengths[:, None]).astype(jnp.float32)  # (B, S)
    sents = jax.random.randint(keys[13], (B, S), 1, VOCAB, dtype=jnp.int32)
    sents = jnp.where(masks > 0, sents, 0)

    ref = reference_forward(params, sents, lengths, masks, hidden_init)

    # f32 matmul operands (exact-mode) — tight check.
    out = event_extractor_forward(params, sents, lengths, masks, hidden_init)
    out = jax.block_until_ready(out)
    assert out.shape == (B * S, O), out.shape
    assert jnp.allclose(out, ref, rtol=5e-3, atol=5e-3), float(jnp.max(jnp.abs(out - ref)))

    # bf16 matmul operands (recommended on v6e/v7x) — looser check.
    out_bf16 = event_extractor_forward(params, sents, lengths, masks, hidden_init,
                                       matmul_dtype=jnp.bfloat16)
    out_bf16 = jax.block_until_ready(out_bf16)
    assert jnp.allclose(out_bf16, ref, rtol=5e-2, atol=5e-2), \
        float(jnp.max(jnp.abs(out_bf16 - ref)))

    # TODO(synk): Dropout is inference-mode identity; pack/pad_packed_sequence is
    # reproduced via per-length masking (no literal packing primitive on TPU).
    print("KERNEL_OK")
</pallas_src>

<mosaic_0001>
module attributes {stable_mosaic.version = 11 : i64} {
  func.func @kernel(%arg0: memref<64x32xf32, #tpu.memory_space<vmem>>, %arg1: memref<8x8x2xf32, #tpu.memory_space<vmem>>, %arg2: memref<4x8x32xf32, #tpu.memory_space<vmem>>, %arg3: memref<32x256xf32, #tpu.memory_space<vmem>>, %arg4: memref<64x256xf32, #tpu.memory_space<vmem>>, %arg5: memref<1x256xf32, #tpu.memory_space<vmem>>, %arg6: memref<64x128xf32, #tpu.memory_space<vmem>>, %arg7: memref<1x128xf32, #tpu.memory_space<vmem>>, %arg8: memref<64x128xf32, #tpu.memory_space<vmem>>, %arg9: memref<64x256xf32, #tpu.memory_space<vmem>>, %arg10: memref<64x64xf32, #tpu.memory_space<vmem>>) attributes {dimension_semantics = [], scalar_prefetch = 0 : i64, scratch_operands = 2 : i64, tpu.core_type = #tpu.core_type<tc>} {
    %c0 = arith.constant 0 : index
    %c0_0 = arith.constant 0 : index
    %0 = vector.load %arg0[%c0, %c0_0] : memref<64x32xf32, #tpu.memory_space<vmem>>, vector<64x32xf32>
    %c0_1 = arith.constant 0 : index
    %c0_2 = arith.constant 0 : index
    %1 = vector.load %arg3[%c0_1, %c0_2] : memref<32x256xf32, #tpu.memory_space<vmem>>, vector<32x256xf32>
    %cst = arith.constant dense<0.000000e+00> : vector<64x256xf32>
    %2 = tpu.matmul %0, %1, %cst {dimension_numbers = #tpu.dot_dimension_numbers<[1], [0], [0], [1], [0, 0, 1, 1], [], []>} : vector<64x32xf32>, vector<32x256xf32>, vector<64x256xf32> -> vector<64x256xf32>
    %c0_3 = arith.constant 0 : index
    %c0_4 = arith.constant 0 : index
    %3 = vector.load %arg5[%c0_3, %c0_4] : memref<1x256xf32, #tpu.memory_space<vmem>>, vector<1x256xf32>
    %4 = vector.broadcast %3 : vector<1x256xf32> to vector<64x256xf32>
    %5 = arith.addf %2, %4 : vector<64x256xf32>
    %c0_5 = arith.constant 0 : index
    %c0_6 = arith.constant 0 : index
    %6 = vector.load %arg9[%c0_5, %c0_6] : memref<64x256xf32, #tpu.memory_space<vmem>>, vector<64x256xf32>
    tpu.vector_store %arg9[%c0_5, %c0_6], %5 {strides = array<i32>} : memref<64x256xf32, #tpu.memory_space<vmem>>, vector<64x256xf32>,
    %c0_7 = arith.constant 0 : index
    %c0_8 = arith.constant 0 : index
    %7 = vector.load %arg4[%c0_7, %c0_8] : memref<64x256xf32, #tpu.memory_space<vmem>>, vector<64x256xf32>
    %c0_9 = arith.constant 0 : index
    %c0_10 = arith.constant 0 : index
    %c0_11 = arith.constant 0 : index
    %8 = vector.load %arg2[%c0_9, %c0_10, %c0_11] : memref<4x8x32xf32, #tpu.memory_space<vmem>>, vector<1x8x32xf32>
    %9 = vector.shape_cast %8 : vector<1x8x32xf32> to vector<8x32xf32>
    %c1 = arith.constant 1 : index
    %c0_12 = arith.constant 0 : index
    %c0_13 = arith.constant 0 : index
    %10 = vector.load %arg2[%c1, %c0_12, %c0_13] : memref<4x8x32xf32, #tpu.memory_space<vmem>>, vector<1x8x32xf32>
    %11 = vector.shape_cast %10 : vector<1x8x32xf32> to vector<8x32xf32>
    %c2 = arith.constant 2 : index
    %c0_14 = arith.constant 0 : index
    %c0_15 = arith.constant 0 : index
    %12 = vector.load %arg2[%c2, %c0_14, %c0_15] : memref<4x8x32xf32, #tpu.memory_space<vmem>>, vector<1x8x32xf32>
    %13 = vector.shape_cast %12 : vector<1x8x32xf32> to vector<8x32xf32>
    %c3 = arith.constant 3 : index
    %c0_16 = arith.constant 0 : index
    %c0_17 = arith.constant 0 : index
    %14 = vector.load %arg2[%c3, %c0_16, %c0_17] : memref<4x8x32xf32, #tpu.memory_space<vmem>>, vector<1x8x32xf32>
    %15 = vector.shape_cast %14 : vector<1x8x32xf32> to vector<8x32xf32>
    %16 = tpu.concatenate %9, %11 in 1 : vector<8x32xf32>, vector<8x32xf32> -> vector<8x64xf32>
    %cst_18 = arith.constant dense<0.000000e+00> : vector<8x256xf32>
    %17 = tpu.matmul %16, %7, %cst_18 {dimension_numbers = #tpu.dot_dimension_numbers<[1], [0], [0], [1], [0, 0, 1, 1], [], []>} : vector<8x64xf32>, vector<64x256xf32>, vector<8x256xf32> -> vector<8x256xf32>
    %c0_19 = arith.constant 0 : index
    %c0_20 = arith.constant 0 : index
    %c0_21 = arith.constant 0 : index
    %18 = vector.load %arg1[%c0_19, %c0_20, %c0_21] : memref<8x8x2xf32, #tpu.memory_space<vmem>>, vector<1x8x2xf32>
    %19 = vector.shape_cast %18 : vector<1x8x2xf32> to vector<8x2xf32>
    %20 = vector.extract_strided_slice %19 {offsets = [0, 0], sizes = [8, 1], strides = [1, 1]} : vector<8x2xf32> to vector<8x1xf32>
    %c0_22 = arith.constant 0 : index
    %c0_23 = arith.constant 0 : index
    %21 = vector.load %arg9[%c0_22, %c0_23] : memref<64x256xf32, #tpu.memory_space<vmem>>, vector<8x128xf32>
    %22 = vector.extract_strided_slice %17 {offsets = [0, 0], sizes = [8, 128], strides = [1, 1]} : vector<8x256xf32> to vector<8x128xf32>
    %23 = arith.addf %21, %22 : vector<8x128xf32>
    %24 = vector.extract_strided_slice %23 {offsets = [0, 0], sizes = [8, 96], strides = [1, 1]} : vector<8x128xf32> to vector<8x96xf32>
    %25 = arith.negf %24 : vector<8x96xf32>
    %26 = math.exp %25 : vector<8x96xf32>
    %cst_24 = arith.constant 1.000000e+00 : f32
    %27 = vector.broadcast %cst_24 : f32 to vector<8x96xf32>
    %28 = arith.addf %27, %26 : vector<8x96xf32>
    %29 = arith.divf %27, %28 : vector<8x96xf32>
    %30 = vector.extract_strided_slice %23 {offsets = [0, 96], sizes = [8, 32], strides = [1, 1]} : vector<8x128xf32> to vector<8x32xf32>
    %31 = math.tanh %30 : vector<8x32xf32>
    %32 = vector.extract_strided_slice %29 {offsets = [0, 0], sizes = [8, 32], strides = [1, 1]} : vector<8x96xf32> to vector<8x32xf32>
    %33 = vector.extract_strided_slice %29 {offsets = [0, 32], sizes = [8, 32], strides = [1, 1]} : vector<8x96xf32> to vector<8x32xf32>
    %34 = vector.extract_strided_slice %29 {offsets = [0, 64], sizes = [8, 32], strides = [1, 1]} : vector<8x96xf32> to vector<8x32xf32>
    %35 = arith.mulf %33, %13 : vector<8x32xf32>
    %36 = arith.mulf %32, %31 : vector<8x32xf32>
    %37 = arith.addf %35, %36 : vector<8x32xf32>
    %38 = math.tanh %37 : vector<8x32xf32>
    %39 = arith.mulf %34, %38 : vector<8x32xf32>
    %cst_25 = arith.constant 0.000000e+00 : f32
    %40 = vector.broadcast %cst_25 : f32 to vector<8x1xf32>
    %41 = arith.cmpf ogt, %20, %40 : vector<8x1xf32>
    %42 = vector.shape_cast %41 : vector<8x1xi1> to vector<8x1xi1>
    %43 = vector.broadcast %42 : vector<8x1xi1> to vector<8x32xi1>
    %44 = arith.select %43, %39, %9 : vector<8x32xi1>, vector<8x32xf32>
    %45 = vector.shape_cast %41 : vector<8x1xi1> to vector<8x1xi1>
    %46 = vector.broadcast %45 : vector<8x1xi1> to vector<8x32xi1>
    %47 = arith.select %46, %37, %13 : vector<8x32xi1>, vector<8x32xf32>
    %48 = vector.extract_strided_slice %19 {offsets = [0, 1], sizes = [8, 1], strides = [1, 1]} : vector<8x2xf32> to vector<8x1xf32>
    %49 = vector.broadcast %48 : vector<8x1xf32> to vector<8x32xf32>
    %50 = arith.mulf %39, %49 : vector<8x32xf32>
    %c0_26 = arith.constant 0 : index
    %c0_27 = arith.constant 0 : index
    %51 = vector.load %arg10[%c0_26, %c0_27] : memref<64x64xf32, #tpu.memory_space<vmem>>, vector<8x32xf32>
    tpu.vector_store %arg10[%c0_26, %c0_27], %50 {strides = array<i32>} : memref<64x64xf32, #tpu.memory_space<vmem>>, vector<8x32xf32>,
    %c7 = arith.constant 7 : index
    %c0_28 = arith.constant 0 : index
    %c0_29 = arith.constant 0 : index
    %52 = vector.load %arg1[%c7, %c0_28, %c0_29] : memref<8x8x2xf32, #tpu.memory_space<vmem>>, vector<1x8x2xf32>
    %53 = vector.shape_cast %52 : vector<1x8x2xf32> to vector<8x2xf32>
    %54 = vector.extract_strided_slice %53 {offsets = [0, 0], sizes = [8, 1], strides = [1, 1]} : vector<8x2xf32> to vector<8x1xf32>
    %c56 = arith.constant 56 : index
    %c128 = arith.constant 128 : index
    %55 = vector.load %arg9[%c56, %c128] : memref<64x256xf32, #tpu.memory_space<vmem>>, vector<8x128xf32>
    %56 = vector.extract_strided_slice %17 {offsets = [0, 128], sizes = [8, 128], strides = [1, 1]} : vector<8x256xf32> to vector<8x128xf32>
    %57 = arith.addf %55, %56 : vector<8x128xf32>
    %58 = vector.extract_strided_slice %57 {offsets = [0, 0], sizes = [8, 96], strides = [1, 1]} : vector<8x128xf32> to vector<8x96xf32>
    %59 = arith.negf %58 : vector<8x96xf32>
    %60 = math.exp %59 : vector<8x96xf32>
    %cst_30 = arith.constant 1.000000e+00 : f32
    %61 = vector.broadcast %cst_30 : f32 to vector<8x96xf32>
    %62 = arith.addf %61, %60 : vector<8x96xf32>
    %63 = arith.divf %61, %62 : vector<8x96xf32>
    %64 = vector.extract_strided_slice %57 {offsets = [0, 96], sizes = [8, 32], strides = [1, 1]} : vector<8x128xf32> to vector<8x32xf32>
    %65 = math.tanh %64 : vector<8x32xf32>
    %66 = vector.extract_strided_slice %63 {offsets = [0, 0], sizes = [8, 32], strides = [1, 1]} : vector<8x96xf32> to vector<8x32xf32>
    %67 = vector.extract_strided_slice %63 {offsets = [0, 32], sizes = [8, 32], strides = [1, 1]} : vector<8x96xf32> to vector<8x32xf32>
    %68 = vector.extract_strided_slice %63 {offsets = [0, 64], sizes = [8, 32], strides = [1, 1]} : vector<8x96xf32> to vector<8x32xf32>
    %69 = arith.mulf %67, %15 : vector<8x32xf32>
    %70 = arith.mulf %66, %65 : vector<8x32xf32>
    %71 = arith.addf %69, %70 : vector<8x32xf32>
    %72 = math.tanh %71 : vector<8x32xf32>
    %73 = arith.mulf %68, %72 : vector<8x32xf32>
    %cst_31 = arith.constant 0.000000e+00 : f32
    %74 = vector.broadcast %cst_31 : f32 to vector<8x1xf32>
    %75 = arith.cmpf ogt, %54, %74 : vector<8x1xf32>
    %76 = vector.shape_cast %75 : vector<8x1xi1> to vector<8x1xi1>
    %77 = vector.broadcast %76 : vector<8x1xi1> to vector<8x32xi1>
    %78 = arith.select %77, %73, %11 : vector<8x32xi1>, vector<8x32xf32>
    %79 = vector.shape_cast %75 : vector<8x1xi1> to vector<8x1xi1>
    %80 = vector.broadcast %79 : vector<8x1xi1> to vector<8x32xi1>
    %81 = arith.select %80, %71, %15 : vector<8x32xi1>, vector<8x32xf32>
    %82 = vector.extract_strided_slice %53 {offsets = [0, 1], sizes = [8, 1], strides = [1, 1]} : vector<8x2xf32> to vector<8x1xf32>
    %83 = vector.broadcast %82 : vector<8x1xf32> to vector<8x32xf32>
    %84 = arith.mulf %73, %83 : vector<8x32xf32>
    %c56_32 = arith.constant 56 : index
    %c32 = arith.constant 32 : index
    %85 = vector.load %arg10[%c56_32, %c32] : memref<64x64xf32, #tpu.memory_space<vmem>>, vector<8x32xf32>
    tpu.vector_store %arg10[%c56_32, %c32], %84 {strides = array<i32>} : memref<64x64xf32, #tpu.memory_space<vmem>>, vector<8x32xf32>,
    %86 = tpu.concatenate %44, %78 in 1 : vector<8x32xf32>, vector<8x32xf32> -> vector<8x64xf32>
    %cst_33 = arith.constant dense<0.000000e+00> : vector<8x256xf32>
    %87 = tpu.matmul %86, %7, %cst_33 {dimension_numbers = #tpu.dot_dimension_numbers<[1], [0], [0], [1], [0, 0, 1, 1], [], []>} : vector<8x64xf32>, vector<64x256xf32>, vector<8x256xf32> -> vector<8x256xf32>
    %c1_34 = arith.constant 1 : index
    %c0_35 = arith.constant 0 : index
    %c0_36 = arith.constant 0 : index
    %88 = vector.load %arg1[%c1_34, %c0_35, %c0_36] : memref<8x8x2xf32, #tpu.memory_space<vmem>>, vector<1x8x2xf32>
    %89 = vector.shape_cast %88 : vector<1x8x2xf32> to vector<8x2xf32>
    %90 = vector.extract_strided_slice %89 {offsets = [0, 0], sizes = [8, 1], strides = [1, 1]} : vector<8x2xf32> to vector<8x1xf32>
    %c8 = arith.constant 8 : index
    %c0_37 = arith.constant 0 : index
    %91 = vector.load %arg9[%c8, %c0_37] : memref<64x256xf32, #tpu.memory_space<vmem>>, vector<8x128xf32>
    %92 = vector.extract_strided_slice %87 {offsets = [0, 0], sizes = [8, 128], strides = [1, 1]} : vector<8x256xf32> to vector<8x128xf32>
    %93 = arith.addf %91, %92 : vector<8x128xf32>
    %94 = vector.extract_strided_slice %93 {offsets = [0, 0], sizes = [8, 96], strides = [1, 1]} : vector<8x128xf32> to vector<8x96xf32>
    %95 = arith.negf %94 : vector<8x96xf32>
    %96 = math.exp %95 : vector<8x96xf32>
    %cst_38 = arith.constant 1.000000e+00 : f32
    %97 = vector.broadcast %cst_38 : f32 to vector<8x96xf32>
    %98 = arith.addf %97, %96 : vector<8x96xf32>
    %99 = arith.divf %97, %98 : vector<8x96xf32>
    %100 = vector.extract_strided_slice %93 {offsets = [0, 96], sizes = [8, 32], strides = [1, 1]} : vector<8x128xf32> to vector<8x32xf32>
    %101 = math.tanh %100 : vector<8x32xf32>
    %102 = vector.extract_strided_slice %99 {offsets = [0, 0], sizes = [8, 32], strides = [1, 1]} : vector<8x96xf32> to vector<8x32xf32>
    %103 = vector.extract_strided_slice %99 {offsets = [0, 32], sizes = [8, 32], strides = [1, 1]} : vector<8x96xf32> to vector<8x32xf32>
    %104 = vector.extract_strided_slice %99 {offsets = [0, 64], sizes = [8, 32], strides = [1, 1]} : vector<8x96xf32> to vector<8x32xf32>
    %105 = arith.mulf %103, %47 : vector<8x32xf32>
    %106 = arith.mulf %102, %101 : vector<8x32xf32>
    %107 = arith.addf %105, %106 : vector<8x32xf32>
    %108 = math.tanh %107 : vector<8x32xf32>
    %109 = arith.mulf %104, %108 : vector<8x32xf32>
    %cst_39 = arith.constant 0.000000e+00 : f32
    %110 = vector.broadcast %cst_39 : f32 to vector<8x1xf32>
    %111 = arith.cmpf ogt, %90, %110 : vector<8x1xf32>
    %112 = vector.shape_cast %111 : vector<8x1xi1> to vector<8x1xi1>
    %113 = vector.broadcast %112 : vector<8x1xi1> to vector<8x32xi1>
    %114 = arith.select %113, %109, %44 : vector<8x32xi1>, vector<8x32xf32>
    %115 = vector.shape_cast %111 : vector<8x1xi1> to vector<8x1xi1>
    %116 = vector.broadcast %115 : vector<8x1xi1> to vector<8x32xi1>
    %117 = arith.select %116, %107, %47 : vector<8x32xi1>, vector<8x32xf32>
    %118 = vector.extract_strided_slice %89 {offsets = [0, 1], sizes = [8, 1], strides = [1, 1]} : vector<8x2xf32> to vector<8x1xf32>
    %119 = vector.broadcast %118 : vector<8x1xf32> to vector<8x32xf32>
    %120 = arith.mulf %109, %119 : vector<8x32xf32>
    %c8_40 = arith.constant 8 : index
    %c0_41 = arith.constant 0 : index
    %121 = vector.load %arg10[%c8_40, %c0_41] : memref<64x64xf32, #tpu.memory_space<vmem>>, vector<8x32xf32>
    tpu.vector_store %arg10[%c8_40, %c0_41], %120 {strides = array<i32>} : memref<64x64xf32, #tpu.memory_space<vmem>>, vector<8x32xf32>,
    %c6 = arith.constant 6 : index
    %c0_42 = arith.constant 0 : index
    %c0_43 = arith.constant 0 : index
    %122 = vector.load %arg1[%c6, %c0_42, %c0_43] : memref<8x8x2xf32, #tpu.memory_space<vmem>>, vector<1x8x2xf32>
    %123 = vector.shape_cast %122 : vector<1x8x2xf32> to vector<8x2xf32>
    %124 = vector.extract_strided_slice %123 {offsets = [0, 0], sizes = [8, 1], strides = [1, 1]} : vector<8x2xf32> to vector<8x1xf32>
    %c48 = arith.constant 48 : index
    %c128_44 = arith.constant 128 : index
    %125 = vector.load %arg9[%c48, %c128_44] : memref<64x256xf32, #tpu.memory_space<vmem>>, vector<8x128xf32>
    %126 = vector.extract_strided_slice %87 {offsets = [0, 128], sizes = [8, 128], strides = [1, 1]} : vector<8x256xf32> to vector<8x128xf32>
    %127 = arith.addf %125, %126 : vector<8x128xf32>
    %128 = vector.extract_strided_slice %127 {offsets = [0, 0], sizes = [8, 96], strides = [1, 1]} : vector<8x128xf32> to vector<8x96xf32>
    %129 = arith.negf %128 : vector<8x96xf32>
    %130 = math.exp %129 : vector<8x96xf32>
    %cst_45 = arith.constant 1.000000e+00 : f32
    %131 = vector.broadcast %cst_45 : f32 to vector<8x96xf32>
    %132 = arith.addf %131, %130 : vector<8x96xf32>
    %133 = arith.divf %131, %132 : vector<8x96xf32>
    %134 = vector.extract_strided_slice %127 {offsets = [0, 96], sizes = [8, 32], strides = [1, 1]} : vector<8x128xf32> to vector<8x32xf32>
    %135 = math.tanh %134 : vector<8x32xf32>
    %136 = vector.extract_strided_slice %133 {offsets = [0, 0], sizes = [8, 32], strides = [1, 1]} : vector<8x96xf32> to vector<8x32xf32>
    %137 = vector.extract_strided_slice %133 {offsets = [0, 32], sizes = [8, 32], strides = [1, 1]} : vector<8x96xf32> to vector<8x32xf32>
    %138 = vector.extract_strided_slice %133 {offsets = [0, 64], sizes = [8, 32], strides = [1, 1]} : vector<8x96xf32> to vector<8x32xf32>
    %139 = arith.mulf %137, %81 : vector<8x32xf32>
    %140 = arith.mulf %136, %135 : vector<8x32xf32>
    %141 = arith.addf %139, %140 : vector<8x32xf32>
    %142 = math.tanh %141 : vector<8x32xf32>
    %143 = arith.mulf %138, %142 : vector<8x32xf32>
    %cst_46 = arith.constant 0.000000e+00 : f32
    %144 = vector.broadcast %cst_46 : f32 to vector<8x1xf32>
    %145 = arith.cmpf ogt, %124, %144 : vector<8x1xf32>
    %146 = vector.shape_cast %145 : vector<8x1xi1> to vector<8x1xi1>
    %147 = vector.broadcast %146 : vector<8x1xi1> to vector<8x32xi1>
    %148 = arith.select %147, %143, %78 : vector<8x32xi1>, vector<8x32xf32>
    %149 = vector.shape_cast %145 : vector<8x1xi1> to vector<8x1xi1>
    %150 = vector.broadcast %149 : vector<8x1xi1> to vector<8x32xi1>
    %151 = arith.select %150, %141, %81 : vector<8x32xi1>, vector<8x32xf32>
    %152 = vector.extract_strided_slice %123 {offsets = [0, 1], sizes = [8, 1], strides = [1, 1]} : vector<8x2xf32> to vector<8x1xf32>
    %153 = vector.broadcast %152 : vector<8x1xf32> to vector<8x32xf32>
    %154 = arith.mulf %143, %153 : vector<8x32xf32>
    %c48_47 = arith.constant 48 : index
    %c32_48 = arith.constant 32 : index
    %155 = vector.load %arg10[%c48_47, %c32_48] : memref<64x64xf32, #tpu.memory_space<vmem>>, vector<8x32xf32>
    tpu.vector_store %arg10[%c48_47, %c32_48], %154 {strides = array<i32>} : memref<64x64xf32, #tpu.memory_space<vmem>>, vector<8x32xf32>,
    %156 = tpu.concatenate %114, %148 in 1 : vector<8x32xf32>, vector<8x32xf32> -> vector<8x64xf32>
    %cst_49 = arith.constant dense<0.000000e+00> : vector<8x256xf32>
    %157 = tpu.matmul %156, %7, %cst_49 {dimension_numbers = #tpu.dot_dimension_numbers<[1], [0], [0], [1], [0, 0, 1, 1], [], []>} : vector<8x64xf32>, vector<64x256xf32>, vector<8x256xf32> -> vector<8x256xf32>
    %c2_50 = arith.constant 2 : index
    %c0_51 = arith.constant 0 : index
    %c0_52 = arith.constant 0 : index
    %158 = vector.load %arg1[%c2_50, %c0_51, %c0_52] : memref<8x8x2xf32, #tpu.memory_space<vmem>>, vector<1x8x2xf32>
    %159 = vector.shape_cast %158 : vector<1x8x2xf32> to vector<8x2xf32>
    %160 = vector.extract_strided_slice %159 {offsets = [0, 0], sizes = [8, 1], strides = [1, 1]} : vector<8x2xf32> to vector<8x1xf32>
    %c16 = arith.constant 16 : index
    %c0_53 = arith.constant 0 : index
    %161 = vector.load %arg9[%c16, %c0_53] : memref<64x256xf32, #tpu.memory_space<vmem>>, vector<8x128xf32>
    %162 = vector.extract_strided_slice %157 {offsets = [0, 0], sizes = [8, 128], strides = [1, 1]} : vector<8x256xf32> to vector<8x128xf32>
    %163 = arith.addf %161, %162 : vector<8x128xf32>
    %164 = vector.extract_strided_slice %163 {offsets = [0, 0], sizes = [8, 96], strides = [1, 1]} : vector<8x128xf32> to vector<8x96xf32>
    %165 = arith.negf %164 : vector<8x96xf32>
    %166 = math.exp %165 : vector<8x96xf32>
    %cst_54 = arith.constant 1.000000e+00 : f32
    %167 = vector.broadcast %cst_54 : f32 to vector<8x96xf32>
    %168 = arith.addf %167, %166 : vector<8x96xf32>
    %169 = arith.divf %167, %168 : vector<8x96xf32>
    %170 = vector.extract_strided_slice %163 {offsets = [0, 96], sizes = [8, 32], strides = [1, 1]} : vector<8x128xf32> to vector<8x32xf32>
    %171 = math.tanh %170 : vector<8x32xf32>
    %172 = vector.extract_strided_slice %169 {offsets = [0, 0], sizes = [8, 32], strides = [1, 1]} : vector<8x96xf32> to vector<8x32xf32>
    %173 = vector.extract_strided_slice %169 {offsets = [0, 32], sizes = [8, 32], strides = [1, 1]} : vector<8x96xf32> to vector<8x32xf32>
    %174 = vector.extract_strided_slice %169 {offsets = [0, 64], sizes = [8, 32], strides = [1, 1]} : vector<8x96xf32> to vector<8x32xf32>
    %175 = arith.mulf %173, %117 : vector<8x32xf32>
    %176 = arith.mulf %172, %171 : vector<8x32xf32>
    %177 = arith.addf %175, %176 : vector<8x32xf32>
    %178 = math.tanh %177 : vector<8x32xf32>
    %179 = arith.mulf %174, %178 : vector<8x32xf32>
    %cst_55 = arith.constant 0.000000e+00 : f32
    %180 = vector.broadcast %cst_55 : f32 to vector<8x1xf32>
    %181 = arith.cmpf ogt, %160, %180 : vector<8x1xf32>
    %182 = vector.shape_cast %181 : vector<8x1xi1> to vector<8x1xi1>
    %183 = vector.broadcast %182 : vector<8x1xi1> to vector<8x32xi1>
    %184 = arith.select %183, %179, %114 : vector<8x32xi1>, vector<8x32xf32>
    %185 = vector.shape_cast %181 : vector<8x1xi1> to vector<8x1xi1>
    %186 = vector.broadcast %185 : vector<8x1xi1> to vector<8x32xi1>
    %187 = arith.select %186, %177, %117 : vector<8x32xi1>, vector<8x32xf32>
    %188 = vector.extract_strided_slice %159 {offsets = [0, 1], sizes = [8, 1], strides = [1, 1]} : vector<8x2xf32> to vector<8x1xf32>
    %189 = vector.broadcast %188 : vector<8x1xf32> to vector<8x32xf32>
    %190 = arith.mulf %179, %189 : vector<8x32xf32>
    %c16_56 = arith.constant 16 : index
    %c0_57 = arith.constant 0 : index
    %191 = vector.load %arg10[%c16_56, %c0_57] : memref<64x64xf32, #tpu.memory_space<vmem>>, vector<8x32xf32>
    tpu.vector_store %arg10[%c16_56, %c0_57], %190 {strides = array<i32>} : memref<64x64xf32, #tpu.memory_space<vmem>>, vector<8x32xf32>,
    %c5 = arith.constant 5 : index
    %c0_58 = arith.constant 0 : index
    %c0_59 = arith.constant 0 : index
    %192 = vector.load %arg1[%c5, %c0_58, %c0_59] : memref<8x8x2xf32, #tpu.memory_space<vmem>>, vector<1x8x2xf32>
    %193 = vector.shape_cast %192 : vector<1x8x2xf32> to vector<8x2xf32>
    %194 = vector.extract_strided_slice %193 {offsets = [0, 0], sizes = [8, 1], strides = [1, 1]} : vector<8x2xf32> to vector<8x1xf32>
    %c40 = arith.constant 40 : index
    %c128_60 = arith.constant 128 : index
    %195 = vector.load %arg9[%c40, %c128_60] : memref<64x256xf32, #tpu.memory_space<vmem>>, vector<8x128xf32>
    %196 = vector.extract_strided_slice %157 {offsets = [0, 128], sizes = [8, 128], strides = [1, 1]} : vector<8x256xf32> to vector<8x128xf32>
    %197 = arith.addf %195, %196 : vector<8x128xf32>
    %198 = vector.extract_strided_slice %197 {offsets = [0, 0], sizes = [8, 96], strides = [1, 1]} : vector<8x128xf32> to vector<8x96xf32>
    %199 = arith.negf %198 : vector<8x96xf32>
    %200 = math.exp %199 : vector<8x96xf32>
    %cst_61 = arith.constant 1.000000e+00 : f32
    %201 = vector.broadcast %cst_61 : f32 to vector<8x96xf32>
    %202 = arith.addf %201, %200 : vector<8x96xf32>
    %203 = arith.divf %201, %202 : vector<8x96xf32>
    %204 = vector.extract_strided_slice %197 {offsets = [0, 96], sizes = [8, 32], strides = [1, 1]} : vector<8x128xf32> to vector<8x32xf32>
    %205 = math.tanh %204 : vector<8x32xf32>
    %206 = vector.extract_strided_slice %203 {offsets = [0, 0], sizes = [8, 32], strides = [1, 1]} : vector<8x96xf32> to vector<8x32xf32>
    %207 = vector.extract_strided_slice %203 {offsets = [0, 32], sizes = [8, 32], strides = [1, 1]} : vector<8x96xf32> to vector<8x32xf32>
    %208 = vector.extract_strided_slice %203 {offsets = [0, 64], sizes = [8, 32], strides = [1, 1]} : vector<8x96xf32> to vector<8x32xf32>
    %209 = arith.mulf %207, %151 : vector<8x32xf32>
    %210 = arith.mulf %206, %205 : vector<8x32xf32>
    %211 = arith.addf %209, %210 : vector<8x32xf32>
    %212 = math.tanh %211 : vector<8x32xf32>
    %213 = arith.mulf %208, %212 : vector<8x32xf32>
    %cst_62 = arith.constant 0.000000e+00 : f32
    %214 = vector.broadcast %cst_62 : f32 to vector<8x1xf32>
    %215 = arith.cmpf ogt, %194, %214 : vector<8x1xf32>
    %216 = vector.shape_cast %215 : vector<8x1xi1> to vector<8x1xi1>
    %217 = vector.broadcast %216 : vector<8x1xi1> to vector<8x32xi1>
    %218 = arith.select %217, %213, %148 : vector<8x32xi1>, vector<8x32xf32>
    %219 = vector.shape_cast %215 : vector<8x1xi1> to vector<8x1xi1>
    %220 = vector.broadcast %219 : vector<8x1xi1> to vector<8x32xi1>
    %221 = arith.select %220, %211, %151 : vector<8x32xi1>, vector<8x32xf32>
    %222 = vector.extract_strided_slice %193 {offsets = [0, 1], sizes = [8, 1], strides = [1, 1]} : vector<8x2xf32> to vector<8x1xf32>
    %223 = vector.broadcast %222 : vector<8x1xf32> to vector<8x32xf32>
    %224 = arith.mulf %213, %223 : vector<8x32xf32>
    %c40_63 = arith.constant 40 : index
    %c32_64 = arith.constant 32 : index
    %225 = vector.load %arg10[%c40_63, %c32_64] : memref<64x64xf32, #tpu.memory_space<vmem>>, vector<8x32xf32>
    tpu.vector_store %arg10[%c40_63, %c32_64], %224 {strides = array<i32>} : memref<64x64xf32, #tpu.memory_space<vmem>>, vector<8x32xf32>,
    %226 = tpu.concatenate %184, %218 in 1 : vector<8x32xf32>, vector<8x32xf32> -> vector<8x64xf32>
    %cst_65 = arith.constant dense<0.000000e+00> : vector<8x256xf32>
    %227 = tpu.matmul %226, %7, %cst_65 {dimension_numbers = #tpu.dot_dimension_numbers<[1], [0], [0], [1], [0, 0, 1, 1], [], []>} : vector<8x64xf32>, vector<64x256xf32>, vector<8x256xf32> -> vector<8x256xf32>
    %c3_66 = arith.constant 3 : index
    %c0_67 = arith.constant 0 : index
    %c0_68 = arith.constant 0 : index
    %228 = vector.load %arg1[%c3_66, %c0_67, %c0_68] : memref<8x8x2xf32, #tpu.memory_space<vmem>>, vector<1x8x2xf32>
    %229 = vector.shape_cast %228 : vector<1x8x2xf32> to vector<8x2xf32>
    %230 = vector.extract_strided_slice %229 {offsets = [0, 0], sizes = [8, 1], strides = [1, 1]} : vector<8x2xf32> to vector<8x1xf32>
    %c24 = arith.constant 24 : index
    %c0_69 = arith.constant 0 : index
    %231 = vector.load %arg9[%c24, %c0_69] : memref<64x256xf32, #tpu.memory_space<vmem>>, vector<8x128xf32>
    %232 = vector.extract_strided_slice %227 {offsets = [0, 0], sizes = [8, 128], strides = [1, 1]} : vector<8x256xf32> to vector<8x128xf32>
    %233 = arith.addf %231, %232 : vector<8x128xf32>
    %234 = vector.extract_strided_slice %233 {offsets = [0, 0], sizes = [8, 96], strides = [1, 1]} : vector<8x128xf32> to vector<8x96xf32>
    %235 = arith.negf %234 : vector<8x96xf32>
    %236 = math.exp %235 : vector<8x96xf32>
    %cst_70 = arith.constant 1.000000e+00 : f32
    %237 = vector.broadcast %cst_70 : f32 to vector<8x96xf32>
    %238 = arith.addf %237, %236 : vector<8x96xf32>
    %239 = arith.divf %237, %238 : vector<8x96xf32>
    %240 = vector.extract_strided_slice %233 {offsets = [0, 96], sizes = [8, 32], strides = [1, 1]} : vector<8x128xf32> to vector<8x32xf32>
    %241 = math.tanh %240 : vector<8x32xf32>
    %242 = vector.extract_strided_slice %239 {offsets = [0, 0], sizes = [8, 32], strides = [1, 1]} : vector<8x96xf32> to vector<8x32xf32>
    %243 = vector.extract_strided_slice %239 {offsets = [0, 32], sizes = [8, 32], strides = [1, 1]} : vector<8x96xf32> to vector<8x32xf32>
    %244 = vector.extract_strided_slice %239 {offsets = [0, 64], sizes = [8, 32], strides = [1, 1]} : vector<8x96xf32> to vector<8x32xf32>
    %245 = arith.mulf %243, %187 : vector<8x32xf32>
    %246 = arith.mulf %242, %241 : vector<8x32xf32>
    %247 = arith.addf %245, %246 : vector<8x32xf32>
    %248 = math.tanh %247 : vector<8x32xf32>
    %249 = arith.mulf %244, %248 : vector<8x32xf32>
    %cst_71 = arith.constant 0.000000e+00 : f32
    %250 = vector.broadcast %cst_71 : f32 to vector<8x1xf32>
    %251 = arith.cmpf ogt, %230, %250 : vector<8x1xf32>
    %252 = vector.shape_cast %251 : vector<8x1xi1> to vector<8x1xi1>
    %253 = vector.broadcast %252 : vector<8x1xi1> to vector<8x32xi1>
    %254 = arith.select %253, %249, %184 : vector<8x32xi1>, vector<8x32xf32>
    %255 = vector.shape_cast %251 : vector<8x1xi1> to vector<8x1xi1>
    %256 = vector.broadcast %255 : vector<8x1xi1> to vector<8x32xi1>
    %257 = arith.select %256, %247, %187 : vector<8x32xi1>, vector<8x32xf32>
    %258 = vector.extract_strided_slice %229 {offsets = [0, 1], sizes = [8, 1], strides = [1, 1]} : vector<8x2xf32> to vector<8x1xf32>
    %259 = vector.broadcast %258 : vector<8x1xf32> to vector<8x32xf32>
    %260 = arith.mulf %249, %259 : vector<8x32xf32>
    %c24_72 = arith.constant 24 : index
    %c0_73 = arith.constant 0 : index
    %261 = vector.load %arg10[%c24_72, %c0_73] : memref<64x64xf32, #tpu.memory_space<vmem>>, vector<8x32xf32>
    tpu.vector_store %arg10[%c24_72, %c0_73], %260 {strides = array<i32>} : memref<64x64xf32, #tpu.memory_space<vmem>>, vector<8x32xf32>,
    %c4 = arith.constant 4 : index
    %c0_74 = arith.constant 0 : index
    %c0_75 = arith.constant 0 : index
    %262 = vector.load %arg1[%c4, %c0_74, %c0_75] : memref<8x8x2xf32, #tpu.memory_space<vmem>>, vector<1x8x2xf32>
    %263 = vector.shape_cast %262 : vector<1x8x2xf32> to vector<8x2xf32>
    %264 = vector.extract_strided_slice %263 {offsets = [0, 0], sizes = [8, 1], strides = [1, 1]} : vector<8x2xf32> to vector<8x1xf32>
    %c32_76 = arith.constant 32 : index
    %c128_77 = arith.constant 128 : index
    %265 = vector.load %arg9[%c32_76, %c128_77] : memref<64x256xf32, #tpu.memory_space<vmem>>, vector<8x128xf32>
    %266 = vector.extract_strided_slice %227 {offsets = [0, 128], sizes = [8, 128], strides = [1, 1]} : vector<8x256xf32> to vector<8x128xf32>
    %267 = arith.addf %265, %266 : vector<8x128xf32>
    %268 = vector.extract_strided_slice %267 {offsets = [0, 0], sizes = [8, 96], strides = [1, 1]} : vector<8x128xf32> to vector<8x96xf32>
    %269 = arith.negf %268 : vector<8x96xf32>
    %270 = math.exp %269 : vector<8x96xf32>
    %cst_78 = arith.constant 1.000000e+00 : f32
    %271 = vector.broadcast %cst_78 : f32 to vector<8x96xf32>
    %272 = arith.addf %271, %270 : vector<8x96xf32>
    %273 = arith.divf %271, %272 : vector<8x96xf32>
    %274 = vector.extract_strided_slice %267 {offsets = [0, 96], sizes = [8, 32], strides = [1, 1]} : vector<8x128xf32> to vector<8x32xf32>
    %275 = math.tanh %274 : vector<8x32xf32>
    %276 = vector.extract_strided_slice %273 {offsets = [0, 0], sizes = [8, 32], strides = [1, 1]} : vector<8x96xf32> to vector<8x32xf32>
    %277 = vector.extract_strided_slice %273 {offsets = [0, 32], sizes = [8, 32], strides = [1, 1]} : vector<8x96xf32> to vector<8x32xf32>
    %278 = vector.extract_strided_slice %273 {offsets = [0, 64], sizes = [8, 32], strides = [1, 1]} : vector<8x96xf32> to vector<8x32xf32>
    %279 = arith.mulf %277, %221 : vector<8x32xf32>
    %280 = arith.mulf %276, %275 : vector<8x32xf32>
    %281 = arith.addf %279, %280 : vector<8x32xf32>
    %282 = math.tanh %281 : vector<8x32xf32>
    %283 = arith.mulf %278, %282 : vector<8x32xf32>
    %cst_79 = arith.constant 0.000000e+00 : f32
    %284 = vector.broadcast %cst_79 : f32 to vector<8x1xf32>
    %285 = arith.cmpf ogt, %264, %284 : vector<8x1xf32>
    %286 = vector.shape_cast %285 : vector<8x1xi1> to vector<8x1xi1>
    %287 = vector.broadcast %286 : vector<8x1xi1> to vector<8x32xi1>
    %288 = arith.select %287, %283, %218 : vector<8x32xi1>, vector<8x32xf32>
    %289 = vector.shape_cast %285 : vector<8x1xi1> to vector<8x1xi1>
    %290 = vector.broadcast %289 : vector<8x1xi1> to vector<8x32xi1>
    %291 = arith.select %290, %281, %221 : vector<8x32xi1>, vector<8x32xf32>
    %292 = vector.extract_strided_slice %263 {offsets = [0, 1], sizes = [8, 1], strides = [1, 1]} : vector<8x2xf32> to vector<8x1xf32>
    %293 = vector.broadcast %292 : vector<8x1xf32> to vector<8x32xf32>
    %294 = arith.mulf %283, %293 : vector<8x32xf32>
    %c32_80 = arith.constant 32 : index
    %c32_81 = arith.constant 32 : index
    %295 = vector.load %arg10[%c32_80, %c32_81] : memref<64x64xf32, #tpu.memory_space<vmem>>, vector<8x32xf32>
    tpu.vector_store %arg10[%c32_80, %c32_81], %294 {strides = array<i32>} : memref<64x64xf32, #tpu.memory_space<vmem>>, vector<8x32xf32>,
    %296 = tpu.concatenate %254, %288 in 1 : vector<8x32xf32>, vector<8x32xf32> -> vector<8x64xf32>
    %cst_82 = arith.constant dense<0.000000e+00> : vector<8x256xf32>
    %297 = tpu.matmul %296, %7, %cst_82 {dimension_numbers = #tpu.dot_dimension_numbers<[1], [0], [0], [1], [0, 0, 1, 1], [], []>} : vector<8x64xf32>, vector<64x256xf32>, vector<8x256xf32> -> vector<8x256xf32>
    %c4_83 = arith.constant 4 : index
    %c0_84 = arith.constant 0 : index
    %c0_85 = arith.constant 0 : index
    %298 = vector.load %arg1[%c4_83, %c0_84, %c0_85] : memref<8x8x2xf32, #tpu.memory_space<vmem>>, vector<1x8x2xf32>
    %299 = vector.shape_cast %298 : vector<1x8x2xf32> to vector<8x2xf32>
    %300 = vector.extract_strided_slice %299 {offsets = [0, 0], sizes = [8, 1], strides = [1, 1]} : vector<8x2xf32> to vector<8x1xf32>
    %c32_86 = arith.constant 32 : index
    %c0_87 = arith.constant 0 : index
    %301 = vector.load %arg9[%c32_86, %c0_87] : memref<64x256xf32, #tpu.memory_space<vmem>>, vector<8x128xf32>
    %302 = vector.extract_strided_slice %297 {offsets = [0, 0], sizes = [8, 128], strides = [1, 1]} : vector<8x256xf32> to vector<8x128xf32>
    %303 = arith.addf %301, %302 : vector<8x128xf32>
    %304 = vector.extract_strided_slice %303 {offsets = [0, 0], sizes = [8, 96], strides = [1, 1]} : vector<8x128xf32> to vector<8x96xf32>
    %305 = arith.negf %304 : vector<8x96xf32>
    %306 = math.exp %305 : vector<8x96xf32>
    %cst_88 = arith.constant 1.000000e+00 : f32
    %307 = vector.broadcast %cst_88 : f32 to vector<8x96xf32>
    %308 = arith.addf %307, %306 : vector<8x96xf32>
    %309 = arith.divf %307, %308 : vector<8x96xf32>
    %310 = vector.extract_strided_slice %303 {offsets = [0, 96], sizes = [8, 32], strides = [1, 1]} : vector<8x128xf32> to vector<8x32xf32>
    %311 = math.tanh %310 : vector<8x32xf32>
    %312 = vector.extract_strided_slice %309 {offsets = [0, 0], sizes = [8, 32], strides = [1, 1]} : vector<8x96xf32> to vector<8x32xf32>
    %313 = vector.extract_strided_slice %309 {offsets = [0, 32], sizes = [8, 32], strides = [1, 1]} : vector<8x96xf32> to vector<8x32xf32>
    %314 = vector.extract_strided_slice %309 {offsets = [0, 64], sizes = [8, 32], strides = [1, 1]} : vector<8x96xf32> to vector<8x32xf32>
    %315 = arith.mulf %313, %257 : vector<8x32xf32>
    %316 = arith.mulf %312, %311 : vector<8x32xf32>
    %317 = arith.addf %315, %316 : vector<8x32xf32>
    %318 = math.tanh %317 : vector<8x32xf32>
    %319 = arith.mulf %314, %318 : vector<8x32xf32>
    %cst_89 = arith.constant 0.000000e+00 : f32
    %320 = vector.broadcast %cst_89 : f32 to vector<8x1xf32>
    %321 = arith.cmpf ogt, %300, %320 : vector<8x1xf32>
    %322 = vector.shape_cast %321 : vector<8x1xi1> to vector<8x1xi1>
    %323 = vector.broadcast %322 : vector<8x1xi1> to vector<8x32xi1>
    %324 = arith.select %323, %319, %254 : vector<8x32xi1>, vector<8x32xf32>
    %325 = vector.shape_cast %321 : vector<8x1xi1> to vector<8x1xi1>
    %326 = vector.broadcast %325 : vector<8x1xi1> to vector<8x32xi1>
    %327 = arith.select %326, %317, %257 : vector<8x32xi1>, vector<8x32xf32>
    %328 = vector.extract_strided_slice %299 {offsets = [0, 1], sizes = [8, 1], strides = [1, 1]} : vector<8x2xf32> to vector<8x1xf32>
    %329 = vector.broadcast %328 : vector<8x1xf32> to vector<8x32xf32>
    %330 = arith.mulf %319, %329 : vector<8x32xf32>
    %c32_90 = arith.constant 32 : index
    %c0_91 = arith.constant 0 : index
    %331 = vector.load %arg10[%c32_90, %c0_91] : memref<64x64xf32, #tpu.memory_space<vmem>>, vector<8x32xf32>
    tpu.vector_store %arg10[%c32_90, %c0_91], %330 {strides = array<i32>} : memref<64x64xf32, #tpu.memory_space<vmem>>, vector<8x32xf32>,
    %c3_92 = arith.constant 3 : index
    %c0_93 = arith.constant 0 : index
    %c0_94 = arith.constant 0 : index
    %332 = vector.load %arg1[%c3_92, %c0_93, %c0_94] : memref<8x8x2xf32, #tpu.memory_space<vmem>>, vector<1x8x2xf32>
    %333 = vector.shape_cast %332 : vector<1x8x2xf32> to vector<8x2xf32>
    %334 = vector.extract_strided_slice %333 {offsets = [0, 0], sizes = [8, 1], strides = [1, 1]} : vector<8x2xf32> to vector<8x1xf32>
    %c24_95 = arith.constant 24 : index
    %c128_96 = arith.constant 128 : index
    %335 = vector.load %arg9[%c24_95, %c128_96] : memref<64x256xf32, #tpu.memory_space<vmem>>, vector<8x128xf32>
    %336 = vector.extract_strided_slice %297 {offsets = [0, 128], sizes = [8, 128], strides = [1, 1]} : vector<8x256xf32> to vector<8x128xf32>
    %337 = arith.addf %335, %336 : vector<8x128xf32>
    %338 = vector.extract_strided_slice %337 {offsets = [0, 0], sizes = [8, 96], strides = [1, 1]} : vector<8x128xf32> to vector<8x96xf32>
    %339 = arith.negf %338 : vector<8x96xf32>
    %340 = math.exp %339 : vector<8x96xf32>
    %cst_97 = arith.constant 1.000000e+00 : f32
    %341 = vector.broadcast %cst_97 : f32 to vector<8x96xf32>
    %342 = arith.addf %341, %340 : vector<8x96xf32>
    %343 = arith.divf %341, %342 : vector<8x96xf32>
    %344 = vector.extract_strided_slice %337 {offsets = [0, 96], sizes = [8, 32], strides = [1, 1]} : vector<8x128xf32> to vector<8x32xf32>
    %345 = math.tanh %344 : vector<8x32xf32>
    %346 = vector.extract_strided_slice %343 {offsets = [0, 0], sizes = [8, 32], strides = [1, 1]} : vector<8x96xf32> to vector<8x32xf32>
    %347 = vector.extract_strided_slice %343 {offsets = [0, 32], sizes = [8, 32], strides = [1, 1]} : vector<8x96xf32> to vector<8x32xf32>
    %348 = vector.extract_strided_slice %343 {offsets = [0, 64], sizes = [8, 32], strides = [1, 1]} : vector<8x96xf32> to vector<8x32xf32>
    %349 = arith.mulf %347, %291 : vector<8x32xf32>
    %350 = arith.mulf %346, %345 : vector<8x32xf32>
    %351 = arith.addf %349, %350 : vector<8x32xf32>
    %352 = math.tanh %351 : vector<8x32xf32>
    %353 = arith.mulf %348, %352 : vector<8x32xf32>
    %cst_98 = arith.constant 0.000000e+00 : f32
    %354 = vector.broadcast %cst_98 : f32 to vector<8x1xf32>
    %355 = arith.cmpf ogt, %334, %354 : vector<8x1xf32>
    %356 = vector.shape_cast %355 : vector<8x1xi1> to vector<8x1xi1>
    %357 = vector.broadcast %356 : vector<8x1xi1> to vector<8x32xi1>
    %358 = arith.select %357, %353, %288 : vector<8x32xi1>, vector<8x32xf32>
    %359 = vector.shape_cast %355 : vector<8x1xi1> to vector<8x1xi1>
    %360 = vector.broadcast %359 : vector<8x1xi1> to vector<8x32xi1>
    %361 = arith.select %360, %351, %291 : vector<8x32xi1>, vector<8x32xf32>
    %362 = vector.extract_strided_slice %333 {offsets = [0, 1], sizes = [8, 1], strides = [1, 1]} : vector<8x2xf32> to vector<8x1xf32>
    %363 = vector.broadcast %362 : vector<8x1xf32> to vector<8x32xf32>
    %364 = arith.mulf %353, %363 : vector<8x32xf32>
    %c24_99 = arith.constant 24 : index
    %c32_100 = arith.constant 32 : index
    %365 = vector.load %arg10[%c24_99, %c32_100] : memref<64x64xf32, #tpu.memory_space<vmem>>, vector<8x32xf32>
    tpu.vector_store %arg10[%c24_99, %c32_100], %364 {strides = array<i32>} : memref<64x64xf32, #tpu.memory_space<vmem>>, vector<8x32xf32>,
    %366 = tpu.concatenate %324, %358 in 1 : vector<8x32xf32>, vector<8x32xf32> -> vector<8x64xf32>
    %cst_101 = arith.constant dense<0.000000e+00> : vector<8x256xf32>
    %367 = tpu.matmul %366, %7, %cst_101 {dimension_numbers = #tpu.dot_dimension_numbers<[1], [0], [0], [1], [0, 0, 1, 1], [], []>} : vector<8x64xf32>, vector<64x256xf32>, vector<8x256xf32> -> vector<8x256xf32>
    %c5_102 = arith.constant 5 : index
    %c0_103 = arith.constant 0 : index
    %c0_104 = arith.constant 0 : index
    %368 = vector.load %arg1[%c5_102, %c0_103, %c0_104] : memref<8x8x2xf32, #tpu.memory_space<vmem>>, vector<1x8x2xf32>
    %369 = vector.shape_cast %368 : vector<1x8x2xf32> to vector<8x2xf32>
    %370 = vector.extract_strided_slice %369 {offsets = [0, 0], sizes = [8, 1], strides = [1, 1]} : vector<8x2xf32> to vector<8x1xf32>
    %c40_105 = arith.constant 40 : index
    %c0_106 = arith.constant 0 : index
    %371 = vector.load %arg9[%c40_105, %c0_106] : memref<64x256xf32, #tpu.memory_space<vmem>>, vector<8x128xf32>
    %372 = vector.extract_strided_slice %367 {offsets = [0, 0], sizes = [8, 128], strides = [1, 1]} : vector<8x256xf32> to vector<8x128xf32>
    %373 = arith.addf %371, %372 : vector<8x128xf32>
    %374 = vector.extract_strided_slice %373 {offsets = [0, 0], sizes = [8, 96], strides = [1, 1]} : vector<8x128xf32> to vector<8x96xf32>
    %375 = arith.negf %374 : vector<8x96xf32>
    %376 = math.exp %375 : vector<8x96xf32>
    %cst_107 = arith.constant 1.000000e+00 : f32
    %377 = vector.broadcast %cst_107 : f32 to vector<8x96xf32>
    %378 = arith.addf %377, %376 : vector<8x96xf32>
    %379 = arith.divf %377, %378 : vector<8x96xf32>
    %380 = vector.extract_strided_slice %373 {offsets = [0, 96], sizes = [8, 32], strides = [1, 1]} : vector<8x128xf32> to vector<8x32xf32>
    %381 = math.tanh %380 : vector<8x32xf32>
    %382 = vector.extract_strided_slice %379 {offsets = [0, 0], sizes = [8, 32], strides = [1, 1]} : vector<8x96xf32> to vector<8x32xf32>
    %383 = vector.extract_strided_slice %379 {offsets = [0, 32], sizes = [8, 32], strides = [1, 1]} : vector<8x96xf32> to vector<8x32xf32>
    %384 = vector.extract_strided_slice %379 {offsets = [0, 64], sizes = [8, 32], strides = [1, 1]} : vector<8x96xf32> to vector<8x32xf32>
    %385 = arith.mulf %383, %327 : vector<8x32xf32>
    %386 = arith.mulf %382, %381 : vector<8x32xf32>
    %387 = arith.addf %385, %386 : vector<8x32xf32>
    %388 = math.tanh %387 : vector<8x32xf32>
    %389 = arith.mulf %384, %388 : vector<8x32xf32>
    %cst_108 = arith.constant 0.000000e+00 : f32
    %390 = vector.broadcast %cst_108 : f32 to vector<8x1xf32>
    %391 = arith.cmpf ogt, %370, %390 : vector<8x1xf32>
    %392 = vector.shape_cast %391 : vector<8x1xi1> to vector<8x1xi1>
    %393 = vector.broadcast %392 : vector<8x1xi1> to vector<8x32xi1>
    %394 = arith.select %393, %389, %324 : vector<8x32xi1>, vector<8x32xf32>
    %395 = vector.shape_cast %391 : vector<8x1xi1> to vector<8x1xi1>
    %396 = vector.broadcast %395 : vector<8x1xi1> to vector<8x32xi1>
    %397 = arith.select %396, %387, %327 : vector<8x32xi1>, vector<8x32xf32>
    %398 = vector.extract_strided_slice %369 {offsets = [0, 1], sizes = [8, 1], strides = [1, 1]} : vector<8x2xf32> to vector<8x1xf32>
    %399 = vector.broadcast %398 : vector<8x1xf32> to vector<8x32xf32>
    %400 = arith.mulf %389, %399 : vector<8x32xf32>
    %c40_109 = arith.constant 40 : index
    %c0_110 = arith.constant 0 : index
    %401 = vector.load %arg10[%c40_109, %c0_110] : memref<64x64xf32, #tpu.memory_space<vmem>>, vector<8x32xf32>
    tpu.vector_store %arg10[%c40_109, %c0_110], %400 {strides = array<i32>} : memref<64x64xf32, #tpu.memory_space<vmem>>, vector<8x32xf32>,
    %c2_111 = arith.constant 2 : index
    %c0_112 = arith.constant 0 : index
    %c0_113 = arith.constant 0 : index
    %402 = vector.load %arg1[%c2_111, %c0_112, %c0_113] : memref<8x8x2xf32, #tpu.memory_space<vmem>>, vector<1x8x2xf32>
    %403 = vector.shape_cast %402 : vector<1x8x2xf32> to vector<8x2xf32>
    %404 = vector.extract_strided_slice %403 {offsets = [0, 0], sizes = [8, 1], strides = [1, 1]} : vector<8x2xf32> to vector<8x1xf32>
    %c16_114 = arith.constant 16 : index
    %c128_115 = arith.constant 128 : index
    %405 = vector.load %arg9[%c16_114, %c128_115] : memref<64x256xf32, #tpu.memory_space<vmem>>, vector<8x128xf32>
    %406 = vector.extract_strided_slice %367 {offsets = [0, 128], sizes = [8, 128], strides = [1, 1]} : vector<8x256xf32> to vector<8x128xf32>
    %407 = arith.addf %405, %406 : vector<8x128xf32>
    %408 = vector.extract_strided_slice %407 {offsets = [0, 0], sizes = [8, 96], strides = [1, 1]} : vector<8x128xf32> to vector<8x96xf32>
    %409 = arith.negf %408 : vector<8x96xf32>
    %410 = math.exp %409 : vector<8x96xf32>
    %cst_116 = arith.constant 1.000000e+00 : f32
    %411 = vector.broadcast %cst_116 : f32 to vector<8x96xf32>
    %412 = arith.addf %411, %410 : vector<8x96xf32>
    %413 = arith.divf %411, %412 : vector<8x96xf32>
    %414 = vector.extract_strided_slice %407 {offsets = [0, 96], sizes = [8, 32], strides = [1, 1]} : vector<8x128xf32> to vector<8x32xf32>
    %415 = math.tanh %414 : vector<8x32xf32>
    %416 = vector.extract_strided_slice %413 {offsets = [0, 0], sizes = [8, 32], strides = [1, 1]} : vector<8x96xf32> to vector<8x32xf32>
    %417 = vector.extract_strided_slice %413 {offsets = [0, 32], sizes = [8, 32], strides = [1, 1]} : vector<8x96xf32> to vector<8x32xf32>
    %418 = vector.extract_strided_slice %413 {offsets = [0, 64], sizes = [8, 32], strides = [1, 1]} : vector<8x96xf32> to vector<8x32xf32>
    %419 = arith.mulf %417, %361 : vector<8x32xf32>
    %420 = arith.mulf %416, %415 : vector<8x32xf32>
    %421 = arith.addf %419, %420 : vector<8x32xf32>
    %422 = math.tanh %421 : vector<8x32xf32>
    %423 = arith.mulf %418, %422 : vector<8x32xf32>
    %cst_117 = arith.constant 0.000000e+00 : f32
    %424 = vector.broadcast %cst_117 : f32 to vector<8x1xf32>
    %425 = arith.cmpf ogt, %404, %424 : vector<8x1xf32>
    %426 = vector.shape_cast %425 : vector<8x1xi1> to vector<8x1xi1>
    %427 = vector.broadcast %426 : vector<8x1xi1> to vector<8x32xi1>
    %428 = arith.select %427, %423, %358 : vector<8x32xi1>, vector<8x32xf32>
    %429 = vector.shape_cast %425 : vector<8x1xi1> to vector<8x1xi1>
    %430 = vector.broadcast %429 : vector<8x1xi1> to vector<8x32xi1>
    %431 = arith.select %430, %421, %361 : vector<8x32xi1>, vector<8x32xf32>
    %432 = vector.extract_strided_slice %403 {offsets = [0, 1], sizes = [8, 1], strides = [1, 1]} : vector<8x2xf32> to vector<8x1xf32>
    %433 = vector.broadcast %432 : vector<8x1xf32> to vector<8x32xf32>
    %434 = arith.mulf %423, %433 : vector<8x32xf32>
    %c16_118 = arith.constant 16 : index
    %c32_119 = arith.constant 32 : index
    %435 = vector.load %arg10[%c16_118, %c32_119] : memref<64x64xf32, #tpu.memory_space<vmem>>, vector<8x32xf32>
    tpu.vector_store %arg10[%c16_118, %c32_119], %434 {strides = array<i32>} : memref<64x64xf32, #tpu.memory_space<vmem>>, vector<8x32xf32>,
    %436 = tpu.concatenate %394, %428 in 1 : vector<8x32xf32>, vector<8x32xf32> -> vector<8x64xf32>
    %cst_120 = arith.constant dense<0.000000e+00> : vector<8x256xf32>
    %437 = tpu.matmul %436, %7, %cst_120 {dimension_numbers = #tpu.dot_dimension_numbers<[1], [0], [0], [1], [0, 0, 1, 1], [], []>} : vector<8x64xf32>, vector<64x256xf32>, vector<8x256xf32> -> vector<8x256xf32>
    %c6_121 = arith.constant 6 : index
    %c0_122 = arith.constant 0 : index
    %c0_123 = arith.constant 0 : index
    %438 = vector.load %arg1[%c6_121, %c0_122, %c0_123] : memref<8x8x2xf32, #tpu.memory_space<vmem>>, vector<1x8x2xf32>
    %439 = vector.shape_cast %438 : vector<1x8x2xf32> to vector<8x2xf32>
    %440 = vector.extract_strided_slice %439 {offsets = [0, 0], sizes = [8, 1], strides = [1, 1]} : vector<8x2xf32> to vector<8x1xf32>
    %c48_124 = arith.constant 48 : index
    %c0_125 = arith.constant 0 : index
    %441 = vector.load %arg9[%c48_124, %c0_125] : memref<64x256xf32, #tpu.memory_space<vmem>>, vector<8x128xf32>
    %442 = vector.extract_strided_slice %437 {offsets = [0, 0], sizes = [8, 128], strides = [1, 1]} : vector<8x256xf32> to vector<8x128xf32>
    %443 = arith.addf %441, %442 : vector<8x128xf32>
    %444 = vector.extract_strided_slice %443 {offsets = [0, 0], sizes = [8, 96], strides = [1, 1]} : vector<8x128xf32> to vector<8x96xf32>
    %445 = arith.negf %444 : vector<8x96xf32>
    %446 = math.exp %445 : vector<8x96xf32>
    %cst_126 = arith.constant 1.000000e+00 : f32
    %447 = vector.broadcast %cst_126 : f32 to vector<8x96xf32>
    %448 = arith.addf %447, %446 : vector<8x96xf32>
    %449 = arith.divf %447, %448 : vector<8x96xf32>
    %450 = vector.extract_strided_slice %443 {offsets = [0, 96], sizes = [8, 32], strides = [1, 1]} : vector<8x128xf32> to vector<8x32xf32>
    %451 = math.tanh %450 : vector<8x32xf32>
    %452 = vector.extract_strided_slice %449 {offsets = [0, 0], sizes = [8, 32], strides = [1, 1]} : vector<8x96xf32> to vector<8x32xf32>
    %453 = vector.extract_strided_slice %449 {offsets = [0, 32], sizes = [8, 32], strides = [1, 1]} : vector<8x96xf32> to vector<8x32xf32>
    %454 = vector.extract_strided_slice %449 {offsets = [0, 64], sizes = [8, 32], strides = [1, 1]} : vector<8x96xf32> to vector<8x32xf32>
    %455 = arith.mulf %453, %397 : vector<8x32xf32>
    %456 = arith.mulf %452, %451 : vector<8x32xf32>
    %457 = arith.addf %455, %456 : vector<8x32xf32>
    %458 = math.tanh %457 : vector<8x32xf32>
    %459 = arith.mulf %454, %458 : vector<8x32xf32>
    %cst_127 = arith.constant 0.000000e+00 : f32
    %460 = vector.broadcast %cst_127 : f32 to vector<8x1xf32>
    %461 = arith.cmpf ogt, %440, %460 : vector<8x1xf32>
    %462 = vector.shape_cast %461 : vector<8x1xi1> to vector<8x1xi1>
    %463 = vector.broadcast %462 : vector<8x1xi1> to vector<8x32xi1>
    %464 = arith.select %463, %459, %394 : vector<8x32xi1>, vector<8x32xf32>
    %465 = vector.shape_cast %461 : vector<8x1xi1> to vector<8x1xi1>
    %466 = vector.broadcast %465 : vector<8x1xi1> to vector<8x32xi1>
    %467 = arith.select %466, %457, %397 : vector<8x32xi1>, vector<8x32xf32>
    %468 = vector.extract_strided_slice %439 {offsets = [0, 1], sizes = [8, 1], strides = [1, 1]} : vector<8x2xf32> to vector<8x1xf32>
    %469 = vector.broadcast %468 : vector<8x1xf32> to vector<8x32xf32>
    %470 = arith.mulf %459, %469 : vector<8x32xf32>
    %c48_128 = arith.constant 48 : index
    %c0_129 = arith.constant 0 : index
    %471 = vector.load %arg10[%c48_128, %c0_129] : memref<64x64xf32, #tpu.memory_space<vmem>>, vector<8x32xf32>
    tpu.vector_store %arg10[%c48_128, %c0_129], %470 {strides = array<i32>} : memref<64x64xf32, #tpu.memory_space<vmem>>, vector<8x32xf32>,
    %c1_130 = arith.constant 1 : index
    %c0_131 = arith.constant 0 : index
    %c0_132 = arith.constant 0 : index
    %472 = vector.load %arg1[%c1_130, %c0_131, %c0_132] : memref<8x8x2xf32, #tpu.memory_space<vmem>>, vector<1x8x2xf32>
    %473 = vector.shape_cast %472 : vector<1x8x2xf32> to vector<8x2xf32>
    %474 = vector.extract_strided_slice %473 {offsets = [0, 0], sizes = [8, 1], strides = [1, 1]} : vector<8x2xf32> to vector<8x1xf32>
    %c8_133 = arith.constant 8 : index
    %c128_134 = arith.constant 128 : index
    %475 = vector.load %arg9[%c8_133, %c128_134] : memref<64x256xf32, #tpu.memory_space<vmem>>, vector<8x128xf32>
    %476 = vector.extract_strided_slice %437 {offsets = [0, 128], sizes = [8, 128], strides = [1, 1]} : vector<8x256xf32> to vector<8x128xf32>
    %477 = arith.addf %475, %476 : vector<8x128xf32>
    %478 = vector.extract_strided_slice %477 {offsets = [0, 0], sizes = [8, 96], strides = [1, 1]} : vector<8x128xf32> to vector<8x96xf32>
    %479 = arith.negf %478 : vector<8x96xf32>
    %480 = math.exp %479 : vector<8x96xf32>
    %cst_135 = arith.constant 1.000000e+00 : f32
    %481 = vector.broadcast %cst_135 : f32 to vector<8x96xf32>
    %482 = arith.addf %481, %480 : vector<8x96xf32>
    %483 = arith.divf %481, %482 : vector<8x96xf32>
    %484 = vector.extract_strided_slice %477 {offsets = [0, 96], sizes = [8, 32], strides = [1, 1]} : vector<8x128xf32> to vector<8x32xf32>
    %485 = math.tanh %484 : vector<8x32xf32>
    %486 = vector.extract_strided_slice %483 {offsets = [0, 0], sizes = [8, 32], strides = [1, 1]} : vector<8x96xf32> to vector<8x32xf32>
    %487 = vector.extract_strided_slice %483 {offsets = [0, 32], sizes = [8, 32], strides = [1, 1]} : vector<8x96xf32> to vector<8x32xf32>
    %488 = vector.extract_strided_slice %483 {offsets = [0, 64], sizes = [8, 32], strides = [1, 1]} : vector<8x96xf32> to vector<8x32xf32>
    %489 = arith.mulf %487, %431 : vector<8x32xf32>
    %490 = arith.mulf %486, %485 : vector<8x32xf32>
    %491 = arith.addf %489, %490 : vector<8x32xf32>
    %492 = math.tanh %491 : vector<8x32xf32>
    %493 = arith.mulf %488, %492 : vector<8x32xf32>
    %cst_136 = arith.constant 0.000000e+00 : f32
    %494 = vector.broadcast %cst_136 : f32 to vector<8x1xf32>
    %495 = arith.cmpf ogt, %474, %494 : vector<8x1xf32>
    %496 = vector.shape_cast %495 : vector<8x1xi1> to vector<8x1xi1>
    %497 = vector.broadcast %496 : vector<8x1xi1> to vector<8x32xi1>
    %498 = arith.select %497, %493, %428 : vector<8x32xi1>, vector<8x32xf32>
    %499 = vector.shape_cast %495 : vector<8x1xi1> to vector<8x1xi1>
    %500 = vector.broadcast %499 : vector<8x1xi1> to vector<8x32xi1>
    %501 = arith.select %500, %491, %431 : vector<8x32xi1>, vector<8x32xf32>
    %502 = vector.extract_strided_slice %473 {offsets = [0, 1], sizes = [8, 1], strides = [1, 1]} : vector<8x2xf32> to vector<8x1xf32>
    %503 = vector.broadcast %502 : vector<8x1xf32> to vector<8x32xf32>
    %504 = arith.mulf %493, %503 : vector<8x32xf32>
    %c8_137 = arith.constant 8 : index
    %c32_138 = arith.constant 32 : index
    %505 = vector.load %arg10[%c8_137, %c32_138] : memref<64x64xf32, #tpu.memory_space<vmem>>, vector<8x32xf32>
    tpu.vector_store %arg10[%c8_137, %c32_138], %504 {strides = array<i32>} : memref<64x64xf32, #tpu.memory_space<vmem>>, vector<8x32xf32>,
    %506 = tpu.concatenate %464, %498 in 1 : vector<8x32xf32>, vector<8x32xf32> -> vector<8x64xf32>
    %cst_139 = arith.constant dense<0.000000e+00> : vector<8x256xf32>
    %507 = tpu.matmul %506, %7, %cst_139 {dimension_numbers = #tpu.dot_dimension_numbers<[1], [0], [0], [1], [0, 0, 1, 1], [], []>} : vector<8x64xf32>, vector<64x256xf32>, vector<8x256xf32> -> vector<8x256xf32>
    %c7_140 = arith.constant 7 : index
    %c0_141 = arith.constant 0 : index
    %c0_142 = arith.constant 0 : index
    %508 = vector.load %arg1[%c7_140, %c0_141, %c0_142] : memref<8x8x2xf32, #tpu.memory_space<vmem>>, vector<1x8x2xf32>
    %509 = vector.shape_cast %508 : vector<1x8x2xf32> to vector<8x2xf32>
    %c56_143 = arith.constant 56 : index
    %c0_144 = arith.constant 0 : index
    %510 = vector.load %arg9[%c56_143, %c0_144] : memref<64x256xf32, #tpu.memory_space<vmem>>, vector<8x128xf32>
    %511 = vector.extract_strided_slice %507 {offsets = [0, 0], sizes = [8, 128], strides = [1, 1]} : vector<8x256xf32> to vector<8x128xf32>
    %512 = arith.addf %510, %511 : vector<8x128xf32>
    %513 = vector.extract_strided_slice %512 {offsets = [0, 0], sizes = [8, 96], strides = [1, 1]} : vector<8x128xf32> to vector<8x96xf32>
    %514 = arith.negf %513 : vector<8x96xf32>
    %515 = math.exp %514 : vector<8x96xf32>
    %cst_145 = arith.constant 1.000000e+00 : f32
    %516 = vector.broadcast %cst_145 : f32 to vector<8x96xf32>
    %517 = arith.addf %516, %515 : vector<8x96xf32>
    %518 = arith.divf %516, %517 : vector<8x96xf32>
    %519 = vector.extract_strided_slice %512 {offsets = [0, 96], sizes = [8, 32], strides = [1, 1]} : vector<8x128xf32> to vector<8x32xf32>
    %520 = math.tanh %519 : vector<8x32xf32>
    %521 = vector.extract_strided_slice %518 {offsets = [0, 0], sizes = [8, 32], strides = [1, 1]} : vector<8x96xf32> to vector<8x32xf32>
    %522 = vector.extract_strided_slice %518 {offsets = [0, 32], sizes = [8, 32], strides = [1, 1]} : vector<8x96xf32> to vector<8x32xf32>
    %523 = vector.extract_strided_slice %518 {offsets = [0, 64], sizes = [8, 32], strides = [1, 1]} : vector<8x96xf32> to vector<8x32xf32>
    %524 = arith.mulf %522, %467 : vector<8x32xf32>
    %525 = arith.mulf %521, %520 : vector<8x32xf32>
    %526 = arith.addf %524, %525 : vector<8x32xf32>
    %527 = math.tanh %526 : vector<8x32xf32>
    %528 = arith.mulf %523, %527 : vector<8x32xf32>
    %529 = vector.extract_strided_slice %509 {offsets = [0, 1], sizes = [8, 1], strides = [1, 1]} : vector<8x2xf32> to vector<8x1xf32>
    %530 = vector.broadcast %529 : vector<8x1xf32> to vector<8x32xf32>
    %531 = arith.mulf %528, %530 : vector<8x32xf32>
    %c56_146 = arith.constant 56 : index
    %c0_147 = arith.constant 0 : index
    %532 = vector.load %arg10[%c56_146, %c0_147] : memref<64x64xf32, #tpu.memory_space<vmem>>, vector<8x32xf32>
    tpu.vector_store %arg10[%c56_146, %c0_147], %531 {strides = array<i32>} : memref<64x64xf32, #tpu.memory_space<vmem>>, vector<8x32xf32>,
    %c0_148 = arith.constant 0 : index
    %c0_149 = arith.constant 0 : index
    %c0_150 = arith.constant 0 : index
    %533 = vector.load %arg1[%c0_148, %c0_149, %c0_150] : memref<8x8x2xf32, #tpu.memory_space<vmem>>, vector<1x8x2xf32>
    %534 = vector.shape_cast %533 : vector<1x8x2xf32> to vector<8x2xf32>
    %c0_151 = arith.constant 0 : index
    %c128_152 = arith.constant 128 : index
    %535 = vector.load %arg9[%c0_151, %c128_152] : memref<64x256xf32, #tpu.memory_space<vmem>>, vector<8x128xf32>
    %536 = vector.extract_strided_slice %507 {offsets = [0, 128], sizes = [8, 128], strides = [1, 1]} : vector<8x256xf32> to vector<8x128xf32>
    %537 = arith.addf %535, %536 : vector<8x128xf32>
    %538 = vector.extract_strided_slice %537 {offsets = [0, 0], sizes = [8, 96], strides = [1, 1]} : vector<8x128xf32> to vector<8x96xf32>
    %539 = arith.negf %538 : vector<8x96xf32>
    %540 = math.exp %539 : vector<8x96xf32>
    %cst_153 = arith.constant 1.000000e+00 : f32
    %541 = vector.broadcast %cst_153 : f32 to vector<8x96xf32>
    %542 = arith.addf %541, %540 : vector<8x96xf32>
    %543 = arith.divf %541, %542 : vector<8x96xf32>
    %544 = vector.extract_strided_slice %537 {offsets = [0, 96], sizes = [8, 32], strides = [1, 1]} : vector<8x128xf32> to vector<8x32xf32>
    %545 = math.tanh %544 : vector<8x32xf32>
    %546 = vector.extract_strided_slice %543 {offsets = [0, 0], sizes = [8, 32], strides = [1, 1]} : vector<8x96xf32> to vector<8x32xf32>
    %547 = vector.extract_strided_slice %543 {offsets = [0, 32], sizes = [8, 32], strides = [1, 1]} : vector<8x96xf32> to vector<8x32xf32>
    %548 = vector.extract_strided_slice %543 {offsets = [0, 64], sizes = [8, 32], strides = [1, 1]} : vector<8x96xf32> to vector<8x32xf32>
    %549 = arith.mulf %547, %501 : vector<8x32xf32>
    %550 = arith.mulf %546, %545 : vector<8x32xf32>
    %551 = arith.addf %549, %550 : vector<8x32xf32>
    %552 = math.tanh %551 : vector<8x32xf32>
    %553 = arith.mulf %548, %552 : vector<8x32xf32>
    %554 = vector.extract_strided_slice %534 {offsets = [0, 1], sizes = [8, 1], strides = [1, 1]} : vector<8x2xf32> to vector<8x1xf32>
    %555 = vector.broadcast %554 : vector<8x1xf32> to vector<8x32xf32>
    %556 = arith.mulf %553, %555 : vector<8x32xf32>
    %c0_154 = arith.constant 0 : index
    %c32_155 = arith.constant 32 : index
    %557 = vector.load %arg10[%c0_154, %c32_155] : memref<64x64xf32, #tpu.memory_space<vmem>>, vector<8x32xf32>
    tpu.vector_store %arg10[%c0_154, %c32_155], %556 {strides = array<i32>} : memref<64x64xf32, #tpu.memory_space<vmem>>, vector<8x32xf32>,
    %c0_156 = arith.constant 0 : index
    %c0_157 = arith.constant 0 : index
    %558 = vector.load %arg10[%c0_156, %c0_157] : memref<64x64xf32, #tpu.memory_space<vmem>>, vector<64x64xf32>
    %c0_158 = arith.constant 0 : index
    %c0_159 = arith.constant 0 : index
    %559 = vector.load %arg6[%c0_158, %c0_159] : memref<64x128xf32, #tpu.memory_space<vmem>>, vector<64x128xf32>
    %cst_160 = arith.constant dense<0.000000e+00> : vector<64x128xf32>
    %560 = tpu.matmul %558, %559, %cst_160 {dimension_numbers = #tpu.dot_dimension_numbers<[1], [0], [0], [1], [0, 0, 1, 1], [], []>} : vector<64x64xf32>, vector<64x128xf32>, vector<64x128xf32> -> vector<64x128xf32>
    %c0_161 = arith.constant 0 : index
    %c0_162 = arith.constant 0 : index
    %561 = vector.load %arg7[%c0_161, %c0_162] : memref<1x128xf32, #tpu.memory_space<vmem>>, vector<1x128xf32>
    %562 = vector.broadcast %561 : vector<1x128xf32> to vector<64x128xf32>
    %563 = arith.addf %560, %562 : vector<64x128xf32>
    %c0_163 = arith.constant 0 : index
    %c0_164 = arith.constant 0 : index
    %564 = vector.load %arg8[%c0_163, %c0_164] : memref<64x128xf32, #tpu.memory_space<vmem>>, vector<64x128xf32>
    tpu.vector_store %arg8[%c0_163, %c0_164], %563 {strides = array<i32>} : memref<64x128xf32, #tpu.memory_space<vmem>>, vector<64x128xf32>,
    return
  }
}

</mosaic_0001>

<llo_original>
// kernel: tpu_custom_call.1
$region0: #{tpu_custom_call.1}
  #allocation0 [shape = 'u32[]', space=smem, size = 0x4, offset = 0x4, fixed_abs, tag = 'smem constant byte address 0x4 - core index']
  #allocation1 [shape = 'u32[144,128]{1,0:T(1,128)}', space=vmem, size = 0x12000, scoped, tag = 'internal scratch']
  #allocation2 [shape = 'f32[64,256]{1,0:T(8,128)}', space=vmem, size = 0x10000, scoped, tag = 'scratch operand']
  #allocation3 [shape = 'f32[64,64]{1,0:T(8,128)}', space=vmem, size = 0x8000, scoped, tag = 'scratch operand']
  %s0 = inlined_call_operand.vmem [shape: f32[64,32], index: 0, kind: input, shape index: {}]
  %s1 = inlined_call_operand.vmem [shape: f32[8,8,2], index: 1, kind: input, shape index: {}]
  %s2 = inlined_call_operand.vmem [shape: f32[4,8,32], index: 2, kind: input, shape index: {}]
  %s3 = inlined_call_operand.hbm [shape: f32[32,256], index: 3, kind: input, shape index: {}]
  %s4 = inlined_call_operand.vmem [shape: f32[64,256], index: 4, kind: input, shape index: {}]
  %s5 = inlined_call_operand.vmem [shape: f32[1,256], index: 5, kind: input, shape index: {}]
  %s6 = inlined_call_operand.hbm [shape: f32[64,128], index: 6, kind: input, shape index: {}]
  %s7 = inlined_call_operand.vmem [shape: f32[1,128], index: 7, kind: input, shape index: {}]
  %s8 = inlined_call_operand.hbm [shape: f32[64,128], index: 8, kind: output, shape index: {}]
  %s9 = sld [smem:[#allocation0]]
  $region50: #{tpu_custom_call.1} parent=0
    _
  %s11 = ssub.s32 1, %s9
  %s12 = scalar_select 0, %s11, %s9
  $region1: #{tpu_custom_call.1} parent=0
    #allocation4 [shape = 'u8[32768]{0}', space=vmem, size = 0x8000, scoped, tag = 'input window, operand 3, single buffered']
    #allocation5 [shape = 's32[1]{0}', space=sflag, size = 0x4, scoped, tag = 'scoped memory for tpu_custom_call.1']
    #allocation6 [shape = 's32[1]{0}', space=sflag, size = 0x4, scoped, tag = 'scoped memory for tpu_custom_call.1']
    #allocation7 [shape = 'u8[32768]{0}', space=vmem, size = 0x8000, scoped, tag = 'input window, operand 6, single buffered']
    #allocation8 [shape = 's32[1]{0}', space=sflag, size = 0x4, scoped, tag = 'scoped memory for tpu_custom_call.1']
    #allocation9 [shape = 'u8[32768]{0}', space=vmem, size = 0x8000, scoped, tag = 'output window, operand 0, single buffered']
    %13 = vsyncpa [#allocation5], 0
    %14 = vsyncpa [#allocation8], 0
    %15 = vsyncpa [#allocation6], 0
    // Predicated region
    $region2: #{tpu_custom_call.1} parent=1 // pred_check
      _
    $region3: #{tpu_custom_call.1} parent=1 // pred_check_branch
      %17 = sbr.rel (0) target = $region5
    $region4: #{tpu_custom_call.1} parent=1 // pred_region
      _
    $region5: #{tpu_custom_call.1} parent=1 // pred_fallthru
      _
    // Predicated region
    $region6: #{tpu_custom_call.1} parent=1 // pred_check
      _
    $region7: #{tpu_custom_call.1} parent=1 // pred_check_branch
      %19 = sbr.rel (0) target = $region9
    $region8: #{tpu_custom_call.1} parent=1 // pred_region
      _
    $region9: #{tpu_custom_call.1} parent=1 // pred_fallthru
      _
    // Predicated region
    $region10: #{tpu_custom_call.1} parent=1 // pred_check
      _
    $region11: #{tpu_custom_call.1} parent=1 // pred_check_branch
      %21 = sbr.rel (0) target = $region13
    $region12: #{tpu_custom_call.1} parent=1 // pred_region
      _
    $region13: #{tpu_custom_call.1} parent=1 // pred_fallthru
      _
    // Predicated region
    $region14: #{tpu_custom_call.1} parent=1 // pred_check
      _
    $region15: #{tpu_custom_call.1} parent=1 // pred_check_branch
      %23 = sbr.rel (0) target = $region17
    $region16: #{tpu_custom_call.1} parent=1 // pred_region
      %s25 = ssub.s32 1024, 1024
      %26 = vsyncadd [#allocation5], %s25
      %s27 = sshll.u32 [#allocation4], 4
      %s28 = int_to_ptr.vmem [resolvable:$true] %s27
      %33 = dma.hbm_to_vmem [thread:$0]  %s3, 1024, %s28, [#allocation5], 256, 256, 16
    $region17: #{tpu_custom_call.1} parent=1 // pred_fallthru
      _
    // Predicated region
    $region18: #{tpu_custom_call.1} parent=1 // pred_check
      _
    $region19: #{tpu_custom_call.1} parent=1 // pred_check_branch
      %35 = sbr.rel (0) target = $region21
    $region20: #{tpu_custom_call.1} parent=1 // pred_region
      _
    $region21: #{tpu_custom_call.1} parent=1 // pred_fallthru
      _
    // Predicated region
    $region22: #{tpu_custom_call.1} parent=1 // pred_check
      _
    $region23: #{tpu_custom_call.1} parent=1 // pred_check_branch
      %37 = sbr.rel (0) target = $region25
    $region24: #{tpu_custom_call.1} parent=1 // pred_region
      _
    $region25: #{tpu_custom_call.1} parent=1 // pred_fallthru
      _
    // Predicated region
    $region26: #{tpu_custom_call.1} parent=1 // pred_check
      _
    $region27: #{tpu_custom_call.1} parent=1 // pred_check_branch
      %39 = sbr.rel (0) target = $region29
    $region28: #{tpu_custom_call.1} parent=1 // pred_region
      %s41 = ssub.s32 1024, 1024
      %42 = vsyncadd [#allocation8], %s41
      %s43 = sshll.u32 [#allocation7], 4
      %s44 = int_to_ptr.vmem [resolvable:$true] %s43
      %49 = dma.hbm_to_vmem [thread:$0]  %s6, 1024, %s44, [#allocation8], 128, 128, 8
    $region29: #{tpu_custom_call.1} parent=1 // pred_fallthru
      _
    // Predicated region
    $region30: #{tpu_custom_call.1} parent=1 // pred_check
      _
    $region31: #{tpu_custom_call.1} parent=1 // pred_check_branch
      %51 = sbr.rel (0) target = $region33
    $region32: #{tpu_custom_call.1} parent=1 // pred_region
      _
    $region33: #{tpu_custom_call.1} parent=1 // pred_fallthru
      _
    // Predicated region
    $region34: #{tpu_custom_call.1} parent=1 // pred_check
      _
    $region35: #{tpu_custom_call.1} parent=1 // pred_check_branch
      %53 = sbr.rel (0) target = $region37
    $region36: #{tpu_custom_call.1} parent=1 // pred_region
      %54 = dma.done [#allocation5], 1024
    $region37: #{tpu_custom_call.1} parent=1 // pred_fallthru
      _
    // Predicated region
    $region38: #{tpu_custom_call.1} parent=1 // pred_check
      _
    $region39: #{tpu_custom_call.1} parent=1 // pred_check_branch
      %56 = sbr.rel (0) target = $region41
    $region40: #{tpu_custom_call.1} parent=1 // pred_region
      %57 = dma.done [#allocation8], 1024
    $region41: #{tpu_custom_call.1} parent=1 // pred_fallthru
      _
    %v58 = vld [vmem:[%s0] sm:$0xff]
    %v59 = vld [vmem:[%s0 + $0x8] sm:$0xff]
    %v60 = vld [vmem:[%s0 + $0x10] sm:$0xff]
    %v61 = vld [vmem:[%s0 + $0x18] sm:$0xff]
    %v62 = vld [vmem:[%s0 + $0x20] sm:$0xff]
    %v63 = vld [vmem:[%s0 + $0x28] sm:$0xff]
    %v64 = vld [vmem:[%s0 + $0x30] sm:$0xff]
    %v65 = vld [vmem:[%s0 + $0x38] sm:$0xff]
    %v66 = vld [vmem:[#allocation4] sm:$0xff]
    %v67 = vld [vmem:[#allocation4 + $0x8] sm:$0xff]
    %v68 = vld [vmem:[#allocation4 + $0x10] sm:$0xff]
    %v69 = vld [vmem:[#allocation4 + $0x18] sm:$0xff]
    %v70 = vld [vmem:[#allocation4 + $0x20] sm:$0xff]
    %v71 = vld [vmem:[#allocation4 + $0x28] sm:$0xff]
    %v72 = vld [vmem:[#allocation4 + $0x30] sm:$0xff]
    %v73 = vld [vmem:[#allocation4 + $0x38] sm:$0xff]
    %v74 = vld [vmem:[%s5] sm:$0x3]
    %v76 = vlaneseq
    %v77 = vshrl.u32 %v76, 7
    %v78 = vsub.s32 0, %v77
    %v79 = vrot.slane %v74, %v78
    %v80 = vlaneseq
    %v81 = vshrl.u32 %v80, 7
    %v82 = vsub.s32 1, %v81
    %v83 = vrot.slane %v74, %v82
    %vm86 = vcmask 261120
    %v88 = vsel %vm86, %v58, 0
    %v91 = vsel %vm86, %v59, 0
    %v94 = vsel %vm86, %v60, 0
    %v97 = vsel %vm86, %v61, 0
    %v100 = vsel %vm86, %v62, 0
    %v103 = vsel %vm86, %v63, 0
    %v106 = vsel %vm86, %v64, 0
    %v109 = vsel %vm86, %v65, 0
    %111 = vmatprep.subr.mxu0 0.0
    %112 = vmatpush1.msra.mxu0 0.0
    %113 = vmatprep.subr.mxu0 0.0
    %114 = vmatpush1.msra.mxu0 0.0
    %115 = vmatprep.subr.mxu0 0.0
    %116 = vmatpush1.msra.mxu0 0.0
    %117 = vmatprep.subr.mxu0 0.0
    %118 = vmatpush1.msra.mxu0 0.0
    %119 = vmatprep.subr.mxu0 0.0
    %120 = vmatpush1.msra.mxu0 0.0
    %121 = vmatprep.subr.mxu0 0.0
    %122 = vmatpush1.msra.mxu0 0.0
    %123 = vmatprep.subr.mxu0 0.0
    %124 = vmatpush1.msra.mxu0 0.0
    %125 = vmatprep.subr.mxu0 0.0
    %126 = vmatpush1.msra.mxu0 0.0
    %127 = vmatprep.subr.mxu0 0.0
    %128 = vmatpush1.msra.mxu0 0.0
    %129 = vmatprep.subr.mxu0 0.0
    %130 = vmatpush1.msra.mxu0 0.0
    %131 = vmatprep.subr.mxu0 0.0
    %132 = vmatpush1.msra.mxu0 0.0
    %133 = vmatprep.subr.mxu0 0.0
    %134 = vmatpush1.msra.mxu0 0.0
    %135 = vmatprep.subr.mxu0 %v73
    %136 = vmatpush1.msra.mxu0 %v72
    %137 = vmatprep.subr.mxu0 %v71
    %138 = vmatpush1.msra.mxu0 %v70
    %139 = vmatprep.subr.mxu0 %v69
    %140 = vmatpush1.msra.mxu0 %v68
    %141 = vmatprep.subr.mxu0 %v67
    %142 = vmatpush1.msra.mxu0 %v66
    %143 = vmatprep.subr.mxu0 0.0
    %144 = vmatpush2.msra.mxu0 0.0
    %145 = vmatprep.subr.mxu0 0.0
    %146 = vmatpush2.msra.mxu0 0.0
    %147 = vmatprep.subr.mxu0 0.0
    %148 = vmatpush2.msra.mxu0 0.0
    %149 = vmatprep.subr.mxu0 0.0
    %150 = vmatpush2.msra.mxu0 0.0
    %151 = vmatprep.subr.mxu0 0.0
    %152 = vmatpush2.msra.mxu0 0.0
    %153 = vmatprep.subr.mxu0 0.0
    %154 = vmatpush2.msra.mxu0 0.0
    %155 = vmatprep.subr.mxu0 0.0
    %156 = vmatpush2.msra.mxu0 0.0
    %157 = vmatprep.subr.mxu0 0.0
    %158 = vmatpush2.msra.mxu0 0.0
    %159 = vmatprep.subr.mxu0 0.0
    %160 = vmatpush2.msra.mxu0 0.0
    %161 = vmatprep.subr.mxu0 0.0
    %162 = vmatpush2.msra.mxu0 0.0
    %163 = vmatprep.subr.mxu0 0.0
    %164 = vmatpush2.msra.mxu0 0.0
    %165 = vmatprep.subr.mxu0 0.0
    %166 = vmatpush2.msra.mxu0 0.0
    %167 = vmatprep.subr.mxu0 0.0
    %168 = vmatpush2.msra.mxu0 0.0
    %169 = vmatprep.subr.mxu0 0.0
    %170 = vmatpush2.msra.mxu0 0.0
    %171 = vmatprep.subr.mxu0 0.0
    %172 = vmatpush2.msra.mxu0 0.0
    %173 = vmatprep.subr.mxu0 0.0
    %174 = vmatpush2.msra.mxu0 0.0
    %175 = vmatprep.mubr.f32.mxu0 0.0
    %176 = vmatmul.mubr.f32.gmra.mxu0 %v88
    %v177 = vpop.f32.mrf.mxu0
    %v178 = vadd.f32 %v79, %v177
    %v179 = vpop.f32.mrf.mxu0
    %v180 = vadd.f32 %v83, %v179
    %181 = vmatprep.mubr.f32.mxu0 0.0
    %182 = vmatmul.mubr.f32.gmra.mxu0 %v91
    %v183 = vpop.f32.mrf.mxu0
    %v184 = vadd.f32 %v79, %v183
    %v185 = vpop.f32.mrf.mxu0
    %v186 = vadd.f32 %v83, %v185
    %187 = vmatprep.mubr.f32.mxu0 0.0
    %188 = vmatmul.mubr.f32.gmra.mxu0 %v94
    %v189 = vpop.f32.mrf.mxu0
    %v190 = vadd.f32 %v79, %v189
    %v191 = vpop.f32.mrf.mxu0
    %v192 = vadd.f32 %v83, %v191
    %193 = vmatprep.mubr.f32.mxu0 0.0
    %194 = vmatmul.mubr.f32.gmra.mxu0 %v97
    %v195 = vpop.f32.mrf.mxu0
    %v196 = vadd.f32 %v79, %v195
    %v197 = vpop.f32.mrf.mxu0
    %v198 = vadd.f32 %v83, %v197
    %199 = vmatprep.mubr.f32.mxu0 0.0
    %200 = vmatmul.mubr.f32.gmra.mxu0 %v100
    %v201 = vpop.f32.mrf.mxu0
    %v202 = vadd.f32 %v79, %v201
    %v203 = vpop.f32.mrf.mxu0
    %v204 = vadd.f32 %v83, %v203
    %205 = vmatprep.mubr.f32.mxu0 0.0
    %206 = vmatmul.mubr.f32.gmra.mxu0 %v103
    %v207 = vpop.f32.mrf.mxu0
    %v208 = vadd.f32 %v79, %v207
    %v209 = vpop.f32.mrf.mxu0
    %v210 = vadd.f32 %v83, %v209
    %211 = vmatprep.mubr.f32.mxu0 0.0
    %212 = vmatmul.mubr.f32.gmra.mxu0 %v106
    %v213 = vpop.f32.mrf.mxu0
    %v214 = vadd.f32 %v79, %v213
    %v215 = vpop.f32.mrf.mxu0
    %v216 = vadd.f32 %v83, %v215
    %217 = vmatprep.mubr.f32.mxu0 0.0
    %218 = vmatmul.mubr.f32.gmra.mxu0 %v109
    %v219 = vpop.f32.mrf.mxu0
    %v220 = vadd.f32 %v79, %v219
    %v221 = vpop.f32.mrf.mxu0
    %v222 = vadd.f32 %v83, %v221
    %223 = vdwg.mxu0
    %224 = vst [vmem:[#allocation2] sm:$0xff] %v178
    %225 = vst [vmem:[#allocation2 + $0x8] sm:$0xff] %v180
    %226 = vst [vmem:[#allocation2 + $0x10] sm:$0xff] %v184
    %227 = vst [vmem:[#allocation2 + $0x18] sm:$0xff] %v186
    %228 = vst [vmem:[#allocation2 + $0x20] sm:$0xff] %v190
    %229 = vst [vmem:[#allocation2 + $0x28] sm:$0xff] %v192
    %230 = vst [vmem:[#allocation2 + $0x30] sm:$0xff] %v196
    %231 = vst [vmem:[#allocation2 + $0x38] sm:$0xff] %v198
    %232 = vst [vmem:[#allocation2 + $0x40] sm:$0xff] %v202
    %233 = vst [vmem:[#allocation2 + $0x48] sm:$0xff] %v204
    %234 = vst [vmem:[#allocation2 + $0x50] sm:$0xff] %v208
    %235 = vst [vmem:[#allocation2 + $0x58] sm:$0xff] %v210
    %236 = vst [vmem:[#allocation2 + $0x60] sm:$0xff] %v214
    %237 = vst [vmem:[#allocation2 + $0x68] sm:$0xff] %v216
    %238 = vst [vmem:[#allocation2 + $0x70] sm:$0xff] %v220
    %239 = vst [vmem:[#allocation2 + $0x78] sm:$0xff] %v222
    %v240 = vld [vmem:[%s4] sm:$0xff]
    %v241 = vld [vmem:[%s4 + $0x8] sm:$0xff]
    %v242 = vld [vmem:[%s4 + $0x10] sm:$0xff]
    %v243 = vld [vmem:[%s4 + $0x18] sm:$0xff]
    %v244 = vld [vmem:[%s4 + $0x20] sm:$0xff]
    %v245 = vld [vmem:[%s4 + $0x28] sm:$0xff]
    %v246 = vld [vmem:[%s4 + $0x30] sm:$0xff]
    %v247 = vld [vmem:[%s4 + $0x38] sm:$0xff]
    %v248 = vld [vmem:[%s4 + $0x40] sm:$0xff]
    %v249 = vld [vmem:[%s4 + $0x48] sm:$0xff]
    %v250 = vld [vmem:[%s4 + $0x50] sm:$0xff]
    %v251 = vld [vmem:[%s4 + $0x58] sm:$0xff]
    %v252 = vld [vmem:[%s4 + $0x60] sm:$0xff]
    %v253 = vld [vmem:[%s4 + $0x68] sm:$0xff]
    %v254 = vld [vmem:[%s4 + $0x70] sm:$0xff]
    %v255 = vld [vmem:[%s4 + $0x78] sm:$0xff]
    %v256 = vld [vmem:[%s2] sm:$0xff]
    %s257 = scalar_lea.vmem %s2, 8
    %v258 = vld [vmem:[%s257] sm:$0xff]
    %s259 = scalar_lea.vmem %s2, 16
    %v260 = vld [vmem:[%s259] sm:$0xff]
    %s261 = scalar_lea.vmem %s2, 24
    %v262 = vld [vmem:[%s261] sm:$0xff]
    %264 = vrot.lane.b32.xlu0 %v258, 32
    %v265 = vpop.permute.xlu0 %264
    %v267 = vsel %vm86, %v256, %v265
    %vm268 = vcmask 523264
    %v270 = vsel %vm268, %v267, 0
    %272 = vmatprep.subr.mxu0 0.0
    %273 = vmatpush1.msra.mxu0 0.0
    %274 = vmatprep.subr.mxu0 0.0
    %275 = vmatpush1.msra.mxu0 0.0
    %276 = vmatprep.subr.mxu0 0.0
    %277 = vmatpush1.msra.mxu0 0.0
    %278 = vmatprep.subr.mxu0 0.0
    %279 = vmatpush1.msra.mxu0 0.0
    %280 = vmatprep.subr.mxu0 0.0
    %281 = vmatpush1.msra.mxu0 0.0
    %282 = vmatprep.subr.mxu0 0.0
    %283 = vmatpush1.msra.mxu0 0.0
    %284 = vmatprep.subr.mxu0 0.0
    %285 = vmatpush1.msra.mxu0 0.0
    %286 = vmatprep.subr.mxu0 0.0
    %287 = vmatpush1.msra.mxu0 0.0
    %288 = vmatprep.subr.mxu0 %v255
    %289 = vmatpush1.msra.mxu0 %v254
    %290 = vmatprep.subr.mxu0 %v253
    %291 = vmatpush1.msra.mxu0 %v252
    %292 = vmatprep.subr.mxu0 %v251
    %293 = vmatpush1.msra.mxu0 %v250
    %294 = vmatprep.subr.mxu0 %v249
    %295 = vmatpush1.msra.mxu0 %v248
    %296 = vmatprep.subr.mxu0 %v247
    %297 = vmatpush1.msra.mxu0 %v246
    %298 = vmatprep.subr.mxu0 %v245
    %299 = vmatpush1.msra.mxu0 %v244
    %300 = vmatprep.subr.mxu0 %v243
    %301 = vmatpush1.msra.mxu0 %v242
    %302 = vmatprep.subr.mxu0 %v241
    %303 = vmatpush1.msra.mxu0 %v240
    %304 = vmatprep.subr.mxu0 0.0
    %305 = vmatpush2.msra.mxu0 0.0
    %306 = vmatprep.subr.mxu0 0.0
    %307 = vmatpush2.msra.mxu0 0.0
    %308 = vmatprep.subr.mxu0 0.0
    %309 = vmatpush2.msra.mxu0 0.0
    %310 = vmatprep.subr.mxu0 0.0
    %311 = vmatpush2.msra.mxu0 0.0
    %312 = vmatprep.subr.mxu0 0.0
    %313 = vmatpush2.msra.mxu0 0.0
    %314 = vmatprep.subr.mxu0 0.0
    %315 = vmatpush2.msra.mxu0 0.0
    %316 = vmatprep.subr.mxu0 0.0
    %317 = vmatpush2.msra.mxu0 0.0
    %318 = vmatprep.subr.mxu0 0.0
    %319 = vmatpush2.msra.mxu0 0.0
    %320 = vmatprep.subr.mxu0 0.0
    %321 = vmatpush2.msra.mxu0 0.0
    %322 = vmatprep.subr.mxu0 0.0
    %323 = vmatpush2.msra.mxu0 0.0
    %324 = vmatprep.subr.mxu0 0.0
    %325 = vmatpush2.msra.mxu0 0.0
    %326 = vmatprep.subr.mxu0 0.0
    %327 = vmatpush2.msra.mxu0 0.0
    %328 = vmatprep.subr.mxu0 0.0
    %329 = vmatpush2.msra.mxu0 0.0
    %330 = vmatprep.subr.mxu0 0.0
    %331 = vmatpush2.msra.mxu0 0.0
    %332 = vmatprep.subr.mxu0 0.0
    %333 = vmatpush2.msra.mxu0 0.0
    %334 = vmatprep.subr.mxu0 0.0
    %335 = vmatpush2.msra.mxu0 0.0
    %336 = vmatprep.mubr.f32.mxu0 0.0
    %337 = vmatmul.mubr.f32.gmra.mxu0 %v270
    %v338 = vpop.f32.mrf.mxu0
    %v339 = vadd.f32 0.0, %v338
    %v340 = vpop.f32.mrf.mxu0
    %v341 = vadd.f32 0.0, %v340
    %342 = vdwg.mxu0
    %v343 = vld [vmem:[%s1] sm:$0xff]
    %v344 = vld [vmem:[#allocation2] sm:$0xff]
    %v345 = vadd.f32 %v344, %v339
    %v346 = vxor.u32 %v345, 2147483648
    %v347 = vmul.f32 %v346, 1.442695
    %v348 = vpow.pop %v347
    %v349 = vadd.f32 %v348, 1.0
    %v350 = vrcp.pop %v349
    %v351 = vmul.f32 1.0, %v350
    %v352 = vtanh.pop %v345
    %354 = vrot.lane.b32.xlu0 %v260, 32
    %v355 = vpop.permute.xlu0 %354
    %v357 = vmul.f32 %v351, %v355
    %359 = vrot.lane.b32.xlu0 %v352, 32
    %v360 = vpop.permute.xlu0 %359
    %v362 = vmul.f32 %v351, %v360
    %364 = vrot.lane.b32.xlu0 %v362, 32
    %v365 = vpop.permute.xlu0 %364
    %v367 = vadd.f32 %v357, %v365
    %v368 = vtanh.pop %v367
    %370 = vrot.lane.b32.xlu0 %v368, 32
    %v371 = vpop.permute.xlu0 %370
    %v373 = vmul.f32 %v351, %v371
    %vm374 = vcmp.gt.f32.partialorder %v343, 0.0
    %v375 = vsel %vm374, 1, 0
    %376 = vset.pattern.permute.xlu0 0
    %377 = vperm.xlu0 %376, %v375
    %v378 = vpop.permute.xlu0 %377
    %vm379 = vcmp.eq.s32.totalorder %v378, 1
    %381 = vrot.lane.b32.xlu0 %v256, 64
    %v382 = vpop.permute.xlu0 %381
    %v384 = vsel %vm379, %v373, %v382
    %v385 = vsel %vm379, %v367, %v355
    %387 = vset.pattern.permute.xlu0 1
    %388 = vperm.xlu0 %387, %v343
    %v389 = vpop.permute.xlu0 %388
    %v391 = vmul.f32 %v373, %v389
    %393 = vrot.lane.b32.xlu0 %v391, 64
    %v394 = vpop.permute.xlu0 %393
    %396 = vst.msk [vmem:[#allocation3] sm:$0xff] %vm86, %v394
    %s397 = scalar_lea.vmem %s1, 56
    %v398 = vld [vmem:[%s397] sm:$0xff]
    %v399 = vld [vmem:[#allocation2 + $0x78] sm:$0xff]
    %v400 = vadd.f32 %v399, %v341
    %v401 = vxor.u32 %v400, 2147483648
    %v402 = vmul.f32 %v401, 1.442695
    %v403 = vpow.pop %v402
    %v404 = vadd.f32 %v403, 1.0
    %v405 = vrcp.pop %v404
    %v406 = vmul.f32 1.0, %v405
    %v407 = vtanh.pop %v400
    %409 = vrot.lane.b32.xlu0 %v262, 32
    %v410 = vpop.permute.xlu0 %409
    %v412 = vmul.f32 %v406, %v410
    %414 = vrot.lane.b32.xlu0 %v407, 32
    %v415 = vpop.permute.xlu0 %414
    %v417 = vmul.f32 %v406, %v415
    %419 = vrot.lane.b32.xlu0 %v417, 32
    %v420 = vpop.permute.xlu0 %419
    %v422 = vadd.f32 %v412, %v420
    %v423 = vtanh.pop %v422
    %425 = vrot.lane.b32.xlu0 %v423, 32
    %v426 = vpop.permute.xlu0 %425
    %v428 = vmul.f32 %v406, %v426
    %vm429 = vcmp.gt.f32.partialorder %v398, 0.0
    %v430 = vsel %vm429, 1, 0
    %431 = vset.pattern.permute.xlu0 0
    %432 = vperm.xlu0 %431, %v430
    %v433 = vpop.permute.xlu0 %432
    %vm434 = vcmp.eq.s32.totalorder %v433, 1
    %435 = vrot.lane.b32.xlu0 %v258, 64
    %v436 = vpop.permute.xlu0 %435
    %v438 = vsel %vm434, %v428, %v436
    %v439 = vsel %vm434, %v422, %v410
    %441 = vset.pattern.permute.xlu0 1
    %442 = vperm.xlu0 %441, %v398
    %v443 = vpop.permute.xlu0 %442
    %v445 = vmul.f32 %v428, %v443
    %447 = vrot.lane.b32.xlu0 %v445, 96
    %v448 = vpop.permute.xlu0 %447
    %vm450 = vcmask 523520
    %451 = vst.msk [vmem:[#allocation3 + $0x38] sm:$0xff] %vm450, %v448
    %453 = vrot.lane.b32.xlu0 %v384, 64
    %v454 = vpop.permute.xlu0 %453
    %457 = vrot.lane.b32.xlu0 %v438, 96
    %v458 = vpop.permute.xlu0 %457
    %v460 = vsel %vm86, %v454, %v458
    %v462 = vsel %vm268, %v460, 0
    %464 = vmatprep.subr.mxu0 0.0
    %465 = vmatpush1.msra.mxu0 0.0
    %466 = vmatprep.subr.mxu0 0.0
    %467 = vmatpush1.msra.mxu0 0.0
    %468 = vmatprep.subr.mxu0 0.0
    %469 = vmatpush1.msra.mxu0 0.0
    %470 = vmatprep.subr.mxu0 0.0
    %471 = vmatpush1.msra.mxu0 0.0
    %472 = vmatprep.subr.mxu0 0.0
    %473 = vmatpush1.msra.mxu0 0.0
    %474 = vmatprep.subr.mxu0 0.0
    %475 = vmatpush1.msra.mxu0 0.0
    %476 = vmatprep.subr.mxu0 0.0
    %477 = vmatpush1.msra.mxu0 0.0
    %478 = vmatprep.subr.mxu0 0.0
    %479 = vmatpush1.msra.mxu0 0.0
    %480 = vmatprep.subr.mxu0 %v255
    %481 = vmatpush1.msra.mxu0 %v254
    %482 = vmatprep.subr.mxu0 %v253
    %483 = vmatpush1.msra.mxu0 %v252
    %484 = vmatprep.subr.mxu0 %v251
    %485 = vmatpush1.msra.mxu0 %v250
    %486 = vmatprep.subr.mxu0 %v249
    %487 = vmatpush1.msra.mxu0 %v248
    %488 = vmatprep.subr.mxu0 %v247
    %489 = vmatpush1.msra.mxu0 %v246
    %490 = vmatprep.subr.mxu0 %v245
    %491 = vmatpush1.msra.mxu0 %v244
    %492 = vmatprep.subr.mxu0 %v243
    %493 = vmatpush1.msra.mxu0 %v242
    %494 = vmatprep.subr.mxu0 %v241
    %495 = vmatpush1.msra.mxu0 %v240
    %496 = vmatprep.subr.mxu0 0.0
    %497 = vmatpush2.msra.mxu0 0.0
    %498 = vmatprep.subr.mxu0 0.0
    %499 = vmatpush2.msra.mxu0 0.0
    %500 = vmatprep.subr.mxu0 0.0
    %501 = vmatpush2.msra.mxu0 0.0
    %502 = vmatprep.subr.mxu0 0.0
    %503 = vmatpush2.msra.mxu0 0.0
    %504 = vmatprep.subr.mxu0 0.0
    %505 = vmatpush2.msra.mxu0 0.0
    %506 = vmatprep.subr.mxu0 0.0
    %507 = vmatpush2.msra.mxu0 0.0
    %508 = vmatprep.subr.mxu0 0.0
    %509 = vmatpush2.msra.mxu0 0.0
    %510 = vmatprep.subr.mxu0 0.0
    %511 = vmatpush2.msra.mxu0 0.0
    %512 = vmatprep.subr.mxu0 0.0
    %513 = vmatpush2.msra.mxu0 0.0
    %514 = vmatprep.subr.mxu0 0.0
    %515 = vmatpush2.msra.mxu0 0.0
    %516 = vmatprep.subr.mxu0 0.0
    %517 = vmatpush2.msra.mxu0 0.0
    %518 = vmatprep.subr.mxu0 0.0
    %519 = vmatpush2.msra.mxu0 0.0
    %520 = vmatprep.subr.mxu0 0.0
    %521 = vmatpush2.msra.mxu0 0.0
    %522 = vmatprep.subr.mxu0 0.0
    %523 = vmatpush2.msra.mxu0 0.0
    %524 = vmatprep.subr.mxu0 0.0
    %525 = vmatpush2.msra.mxu0 0.0
    %526 = vmatprep.subr.mxu0 0.0
    %527 = vmatpush2.msra.mxu0 0.0
    %528 = vmatprep.mubr.f32.mxu0 0.0
    %529 = vmatmul.mubr.f32.gmra.mxu0 %v462
    %v530 = vpop.f32.mrf.mxu0
    %v531 = vadd.f32 0.0, %v530
    %v532 = vpop.f32.mrf.mxu0
    %v533 = vadd.f32 0.0, %v532
    %534 = vdwg.mxu0
    %s535 = scalar_lea.vmem %s1, 8
    %v536 = vld [vmem:[%s535] sm:$0xff]
    %v537 = vld [vmem:[#allocation2 + $0x10] sm:$0xff]
    %v538 = vadd.f32 %v537, %v531
    %v539 = vxor.u32 %v538, 2147483648
    %v540 = vmul.f32 %v539, 1.442695
    %v541 = vpow.pop %v540
    %v542 = vadd.f32 %v541, 1.0
    %v543 = vrcp.pop %v542
    %v544 = vmul.f32 1.0, %v543
    %v545 = vtanh.pop %v538
    %v546 = vmul.f32 %v544, %v385
    %548 = vrot.lane.b32.xlu0 %v545, 32
    %v549 = vpop.permute.xlu0 %548
    %v551 = vmul.f32 %v544, %v549
    %553 = vrot.lane.b32.xlu0 %v551, 32
    %v554 = vpop.permute.xlu0 %553
    %v556 = vadd.f32 %v546, %v554
    %v557 = vtanh.pop %v556
    %559 = vrot.lane.b32.xlu0 %v557, 32
    %v560 = vpop.permute.xlu0 %559
    %v562 = vmul.f32 %v544, %v560
    %vm563 = vcmp.gt.f32.partialorder %v536, 0.0
    %v564 = vsel %vm563, 1, 0
    %565 = vset.pattern.permute.xlu0 0
    %566 = vperm.xlu0 %565, %v564
    %v567 = vpop.permute.xlu0 %566
    %vm568 = vcmp.eq.s32.totalorder %v567, 1
    %v569 = vsel %vm568, %v562, %v384
    %v570 = vsel %vm568, %v556, %v385
    %572 = vset.pattern.permute.xlu0 1
    %573 = vperm.xlu0 %572, %v536
    %v574 = vpop.permute.xlu0 %573
    %v576 = vmul.f32 %v562, %v574
    %578 = vrot.lane.b32.xlu0 %v576, 64
    %v579 = vpop.permute.xlu0 %578
    %581 = vst.msk [vmem:[#allocation3 + $0x8] sm:$0xff] %vm86, %v579
    %s582 = scalar_lea.vmem %s1, 48
    %v583 = vld [vmem:[%s582] sm:$0xff]
    %v584 = vld [vmem:[#allocation2 + $0x68] sm:$0xff]
    %v585 = vadd.f32 %v584, %v533
    %v586 = vxor.u32 %v585, 2147483648
    %v587 = vmul.f32 %v586, 1.442695
    %v588 = vpow.pop %v587
    %v589 = vadd.f32 %v588, 1.0
    %v590 = vrcp.pop %v589
    %v591 = vmul.f32 1.0, %v590
    %v592 = vtanh.pop %v585
    %v593 = vmul.f32 %v591, %v439
    %595 = vrot.lane.b32.xlu0 %v592, 32
    %v596 = vpop.permute.xlu0 %595
    %v598 = vmul.f32 %v591, %v596
    %600 = vrot.lane.b32.xlu0 %v598, 32
    %v601 = vpop.permute.xlu0 %600
    %v603 = vadd.f32 %v593, %v601
    %v604 = vtanh.pop %v603
    %606 = vrot.lane.b32.xlu0 %v604, 32
    %v607 = vpop.permute.xlu0 %606
    %v609 = vmul.f32 %v591, %v607
    %vm610 = vcmp.gt.f32.partialorder %v583, 0.0
    %v611 = vsel %vm610, 1, 0
    %612 = vset.pattern.permute.xlu0 0
    %613 = vperm.xlu0 %612, %v611
    %v614 = vpop.permute.xlu0 %613
    %vm615 = vcmp.eq.s32.totalorder %v614, 1
    %v616 = vsel %vm615, %v609, %v438
    %v617 = vsel %vm615, %v603, %v439
    %619 = vset.pattern.permute.xlu0 1
    %620 = vperm.xlu0 %619, %v583
    %v621 = vpop.permute.xlu0 %620
    %v623 = vmul.f32 %v609, %v621
    %625 = vrot.lane.b32.xlu0 %v623, 96
    %v626 = vpop.permute.xlu0 %625
    %628 = vst.msk [vmem:[#allocation3 + $0x30] sm:$0xff] %vm450, %v626
    %630 = vrot.lane.b32.xlu0 %v569, 64
    %v631 = vpop.permute.xlu0 %630
    %634 = vrot.lane.b32.xlu0 %v616, 96
    %v635 = vpop.permute.xlu0 %634
    %v637 = vsel %vm86, %v631, %v635
    %v639 = vsel %vm268, %v637, 0
    %641 = vmatprep.subr.mxu0 0.0
    %642 = vmatpush1.msra.mxu0 0.0
    %643 = vmatprep.subr.mxu0 0.0
    %644 = vmatpush1.msra.mxu0 0.0
    %645 = vmatprep.subr.mxu0 0.0
    %646 = vmatpush1.msra.mxu0 0.0
    %647 = vmatprep.subr.mxu0 0.0
    %648 = vmatpush1.msra.mxu0 0.0
    %649 = vmatprep.subr.mxu0 0.0
    %650 = vmatpush1.msra.mxu0 0.0
    %651 = vmatprep.subr.mxu0 0.0
    %652 = vmatpush1.msra.mxu0 0.0
    %653 = vmatprep.subr.mxu0 0.0
    %654 = vmatpush1.msra.mxu0 0.0
    %655 = vmatprep.subr.mxu0 0.0
    %656 = vmatpush1.msra.mxu0 0.0
    %657 = vmatprep.subr.mxu0 %v255
    %658 = vmatpush1.msra.mxu0 %v254
    %659 = vmatprep.subr.mxu0 %v253
    %660 = vmatpush1.msra.mxu0 %v252
    %661 = vmatprep.subr.mxu0 %v251
    %662 = vmatpush1.msra.mxu0 %v250
    %663 = vmatprep.subr.mxu0 %v249
    %664 = vmatpush1.msra.mxu0 %v248
    %665 = vmatprep.subr.mxu0 %v247
    %666 = vmatpush1.msra.mxu0 %v246
    %667 = vmatprep.subr.mxu0 %v245
    %668 = vmatpush1.msra.mxu0 %v244
    %669 = vmatprep.subr.mxu0 %v243
    %670 = vmatpush1.msra.mxu0 %v242
    %671 = vmatprep.subr.mxu0 %v241
    %672 = vmatpush1.msra.mxu0 %v240
    %673 = vmatprep.subr.mxu0 0.0
    %674 = vmatpush2.msra.mxu0 0.0
    %675 = vmatprep.subr.mxu0 0.0
    %676 = vmatpush2.msra.mxu0 0.0
    %677 = vmatprep.subr.mxu0 0.0
    %678 = vmatpush2.msra.mxu0 0.0
    %679 = vmatprep.subr.mxu0 0.0
    %680 = vmatpush2.msra.mxu0 0.0
    %681 = vmatprep.subr.mxu0 0.0
    %682 = vmatpush2.msra.mxu0 0.0
    %683 = vmatprep.subr.mxu0 0.0
    %684 = vmatpush2.msra.mxu0 0.0
    %685 = vmatprep.subr.mxu0 0.0
    %686 = vmatpush2.msra.mxu0 0.0
    %687 = vmatprep.subr.mxu0 0.0
    %688 = vmatpush2.msra.mxu0 0.0
    %689 = vmatprep.subr.mxu0 0.0
    %690 = vmatpush2.msra.mxu0 0.0
    %691 = vmatprep.subr.mxu0 0.0
    %692 = vmatpush2.msra.mxu0 0.0
    %693 = vmatprep.subr.mxu0 0.0
    %694 = vmatpush2.msra.mxu0 0.0
    %695 = vmatprep.subr.mxu0 0.0
    %696 = vmatpush2.msra.mxu0 0.0
    %697 = vmatprep.subr.mxu0 0.0
    %698 = vmatpush2.msra.mxu0 0.0
    %699 = vmatprep.subr.mxu0 0.0
    %700 = vmatpush2.msra.mxu0 0.0
    %701 = vmatprep.subr.mxu0 0.0
    %702 = vmatpush2.msra.mxu0 0.0
    %703 = vmatprep.subr.mxu0 0.0
    %704 = vmatpush2.msra.mxu0 0.0
    %705 = vmatprep.mubr.f32.mxu0 0.0
    %706 = vmatmul.mubr.f32.gmra.mxu0 %v639
    %v707 = vpop.f32.mrf.mxu0
    %v708 = vadd.f32 0.0, %v707
    %v709 = vpop.f32.mrf.mxu0
    %v710 = vadd.f32 0.0, %v709
    %711 = vdwg.mxu0
    %s712 = scalar_lea.vmem %s1, 16
    %v713 = vld [vmem:[%s712] sm:$0xff]
    %v714 = vld [vmem:[#allocation2 + $0x20] sm:$0xff]
    %v715 = vadd.f32 %v714, %v708
    %v716 = vxor.u32 %v715, 2147483648
    %v717 = vmul.f32 %v716, 1.442695
    %v718 = vpow.pop %v717
    %v719 = vadd.f32 %v718, 1.0
    %v720 = vrcp.pop %v719
    %v721 = vmul.f32 1.0, %v720
    %v722 = vtanh.pop %v715
    %v723 = vmul.f32 %v721, %v570
    %725 = vrot.lane.b32.xlu0 %v722, 32
    %v726 = vpop.permute.xlu0 %725
    %v728 = vmul.f32 %v721, %v726
    %730 = vrot.lane.b32.xlu0 %v728, 32
    %v731 = vpop.permute.xlu0 %730
    %v733 = vadd.f32 %v723, %v731
    %v734 = vtanh.pop %v733
    %736 = vrot.lane.b32.xlu0 %v734, 32
    %v737 = vpop.permute.xlu0 %736
    %v739 = vmul.f32 %v721, %v737
    %vm740 = vcmp.gt.f32.partialorder %v713, 0.0
    %v741 = vsel %vm740, 1, 0
    %742 = vset.pattern.permute.xlu0 0
    %743 = vperm.xlu0 %742, %v741
    %v744 = vpop.permute.xlu0 %743
    %vm745 = vcmp.eq.s32.totalorder %v744, 1
    %v746 = vsel %vm745, %v739, %v569
    %v747 = vsel %vm745, %v733, %v570
    %749 = vset.pattern.permute.xlu0 1
    %750 = vperm.xlu0 %749, %v713
    %v751 = vpop.permute.xlu0 %750
    %v753 = vmul.f32 %v739, %v751
    %755 = vrot.lane.b32.xlu0 %v753, 64
    %v756 = vpop.permute.xlu0 %755
    %758 = vst.msk [vmem:[#allocation3 + $0x10] sm:$0xff] %vm86, %v756
    %s759 = scalar_lea.vmem %s1, 40
    %v760 = vld [vmem:[%s759] sm:$0xff]
    %v761 = vld [vmem:[#allocation2 + $0x58] sm:$0xff]
    %v762 = vadd.f32 %v761, %v710
    %v763 = vxor.u32 %v762, 2147483648
    %v764 = vmul.f32 %v763, 1.442695
    %v765 = vpow.pop %v764
    %v766 = vadd.f32 %v765, 1.0
    %v767 = vrcp.pop %v766
    %v768 = vmul.f32 1.0, %v767
    %v769 = vtanh.pop %v762
    %v770 = vmul.f32 %v768, %v617
    %772 = vrot.lane.b32.xlu0 %v769, 32
    %v773 = vpop.permute.xlu0 %772
    %v775 = vmul.f32 %v768, %v773
    %777 = vrot.lane.b32.xlu0 %v775, 32
    %v778 = vpop.permute.xlu0 %777
    %v780 = vadd.f32 %v770, %v778
    %v781 = vtanh.pop %v780
    %783 = vrot.lane.b32.xlu0 %v781, 32
    %v784 = vpop.permute.xlu0 %783
    %v786 = vmul.f32 %v768, %v784
    %vm787 = vcmp.gt.f32.partialorder %v760, 0.0
    %v788 = vsel %vm787, 1, 0
    %789 = vset.pattern.permute.xlu0 0
    %790 = vperm.xlu0 %789, %v788
    %v791 = vpop.permute.xlu0 %790
    %vm792 = vcmp.eq.s32.totalorder %v791, 1
    %v793 = vsel %vm792, %v786, %v616
    %v794 = vsel %vm792, %v780, %v617
    %796 = vset.pattern.permute.xlu0 1
    %797 = vperm.xlu0 %796, %v760
    %v798 = vpop.permute.xlu0 %797
    %v800 = vmul.f32 %v786, %v798
    %802 = vrot.lane.b32.xlu0 %v800, 96
    %v803 = vpop.permute.xlu0 %802
    %805 = vst.msk [vmem:[#allocation3 + $0x28] sm:$0xff] %vm450, %v803
    %807 = vrot.lane.b32.xlu0 %v746, 64
    %v808 = vpop.permute.xlu0 %807
    %811 = vrot.lane.b32.xlu0 %v793, 96
    %v812 = vpop.permute.xlu0 %811
    %v814 = vsel %vm86, %v808, %v812
    %v816 = vsel %vm268, %v814, 0
    %818 = vmatprep.subr.mxu0 0.0
    %819 = vmatpush1.msra.mxu0 0.0
    %820 = vmatprep.subr.mxu0 0.0
    %821 = vmatpush1.msra.mxu0 0.0
    %822 = vmatprep.subr.mxu0 0.0
    %823 = vmatpush1.msra.mxu0 0.0
    %824 = vmatprep.subr.mxu0 0.0
    %825 = vmatpush1.msra.mxu0 0.0
    %826 = vmatprep.subr.mxu0 0.0
    %827 = vmatpush1.msra.mxu0 0.0
    %828 = vmatprep.subr.mxu0 0.0
    %829 = vmatpush1.msra.mxu0 0.0
    %830 = vmatprep.subr.mxu0 0.0
    %831 = vmatpush1.msra.mxu0 0.0
    %832 = vmatprep.subr.mxu0 0.0
    %833 = vmatpush1.msra.mxu0 0.0
    %834 = vmatprep.subr.mxu0 %v255
    %835 = vmatpush1.msra.mxu0 %v254
    %836 = vmatprep.subr.mxu0 %v253
    %837 = vmatpush1.msra.mxu0 %v252
    %838 = vmatprep.subr.mxu0 %v251
    %839 = vmatpush1.msra.mxu0 %v250
    %840 = vmatprep.subr.mxu0 %v249
    %841 = vmatpush1.msra.mxu0 %v248
    %842 = vmatprep.subr.mxu0 %v247
    %843 = vmatpush1.msra.mxu0 %v246
    %844 = vmatprep.subr.mxu0 %v245
    %845 = vmatpush1.msra.mxu0 %v244
    %846 = vmatprep.subr.mxu0 %v243
    %847 = vmatpush1.msra.mxu0 %v242
    %848 = vmatprep.subr.mxu0 %v241
    %849 = vmatpush1.msra.mxu0 %v240
    %850 = vmatprep.subr.mxu0 0.0
    %851 = vmatpush2.msra.mxu0 0.0
    %852 = vmatprep.subr.mxu0 0.0
    %853 = vmatpush2.msra.mxu0 0.0
    %854 = vmatprep.subr.mxu0 0.0
    %855 = vmatpush2.msra.mxu0 0.0
    %856 = vmatprep.subr.mxu0 0.0
    %857 = vmatpush2.msra.mxu0 0.0
    %858 = vmatprep.subr.mxu0 0.0
    %859 = vmatpush2.msra.mxu0 0.0
    %860 = vmatprep.subr.mxu0 0.0
    %861 = vmatpush2.msra.mxu0 0.0
    %862 = vmatprep.subr.mxu0 0.0
    %863 = vmatpush2.msra.mxu0 0.0
    %864 = vmatprep.subr.mxu0 0.0
    %865 = vmatpush2.msra.mxu0 0.0
    %866 = vmatprep.subr.mxu0 0.0
    %867 = vmatpush2.msra.mxu0 0.0
    %868 = vmatprep.subr.mxu0 0.0
    %869 = vmatpush2.msra.mxu0 0.0
    %870 = vmatprep.subr.mxu0 0.0
    %871 = vmatpush2.msra.mxu0 0.0
    %872 = vmatprep.subr.mxu0 0.0
    %873 = vmatpush2.msra.mxu0 0.0
    %874 = vmatprep.subr.mxu0 0.0
    %875 = vmatpush2.msra.mxu0 0.0
    %876 = vmatprep.subr.mxu0 0.0
    %877 = vmatpush2.msra.mxu0 0.0
    %878 = vmatprep.subr.mxu0 0.0
    %879 = vmatpush2.msra.mxu0 0.0
    %880 = vmatprep.subr.mxu0 0.0
    %881 = vmatpush2.msra.mxu0 0.0
    %882 = vmatprep.mubr.f32.mxu0 0.0
    %883 = vmatmul.mubr.f32.gmra.mxu0 %v816
    %v884 = vpop.f32.mrf.mxu0
    %v885 = vadd.f32 0.0, %v884
    %v886 = vpop.f32.mrf.mxu0
    %v887 = vadd.f32 0.0, %v886
    %888 = vdwg.mxu0
    %s889 = scalar_lea.vmem %s1, 24
    %v890 = vld [vmem:[%s889] sm:$0xff]
    %v891 = vld [vmem:[#allocation2 + $0x30] sm:$0xff]
    %v892 = vadd.f32 %v891, %v885
    %v893 = vxor.u32 %v892, 2147483648
    %v894 = vmul.f32 %v893, 1.442695
    %v895 = vpow.pop %v894
    %v896 = vadd.f32 %v895, 1.0
    %v897 = vrcp.pop %v896
    %v898 = vmul.f32 1.0, %v897
    %v899 = vtanh.pop %v892
    %v900 = vmul.f32 %v898, %v747
    %902 = vrot.lane.b32.xlu0 %v899, 32
    %v903 = vpop.permute.xlu0 %902
    %v905 = vmul.f32 %v898, %v903
    %907 = vrot.lane.b32.xlu0 %v905, 32
    %v908 = vpop.permute.xlu0 %907
    %v910 = vadd.f32 %v900, %v908
    %v911 = vtanh.pop %v910
    %913 = vrot.lane.b32.xlu0 %v911, 32
    %v914 = vpop.permute.xlu0 %913
    %v916 = vmul.f32 %v898, %v914
    %vm917 = vcmp.gt.f32.partialorder %v890, 0.0
    %v918 = vsel %vm917, 1, 0
    %919 = vset.pattern.permute.xlu0 0
    %920 = vperm.xlu0 %919, %v918
    %v921 = vpop.permute.xlu0 %920
    %vm922 = vcmp.eq.s32.totalorder %v921, 1
    %v923 = vsel %vm922, %v916, %v746
    %v924 = vsel %vm922, %v910, %v747
    %926 = vset.pattern.permute.xlu0 1
    %927 = vperm.xlu0 %926, %v890
    %v928 = vpop.permute.xlu0 %927
    %v930 = vmul.f32 %v916, %v928
    %932 = vrot.lane.b32.xlu0 %v930, 64
    %v933 = vpop.permute.xlu0 %932
    %935 = vst.msk [vmem:[#allocation3 + $0x18] sm:$0xff] %vm86, %v933
    %s936 = scalar_lea.vmem %s1, 32
    %v937 = vld [vmem:[%s936] sm:$0xff]
    %v938 = vld [vmem:[#allocation2 + $0x48] sm:$0xff]
    %v939 = vadd.f32 %v938, %v887
    %v940 = vxor.u32 %v939, 2147483648
    %v941 = vmul.f32 %v940, 1.442695
    %v942 = vpow.pop %v941
    %v943 = vadd.f32 %v942, 1.0
    %v944 = vrcp.pop %v943
    %v945 = vmul.f32 1.0, %v944
    %v946 = vtanh.pop %v939
    %v947 = vmul.f32 %v945, %v794
    %949 = vrot.lane.b32.xlu0 %v946, 32
    %v950 = vpop.permute.xlu0 %949
    %v952 = vmul.f32 %v945, %v950
    %954 = vrot.lane.b32.xlu0 %v952, 32
    %v955 = vpop.permute.xlu0 %954
    %v957 = vadd.f32 %v947, %v955
    %v958 = vtanh.pop %v957
    %960 = vrot.lane.b32.xlu0 %v958, 32
    %v961 = vpop.permute.xlu0 %960
    %v963 = vmul.f32 %v945, %v961
    %vm964 = vcmp.gt.f32.partialorder %v937, 0.0
    %v965 = vsel %vm964, 1, 0
    %966 = vset.pattern.permute.xlu0 0
    %967 = vperm.xlu0 %966, %v965
    %v968 = vpop.permute.xlu0 %967
    %vm969 = vcmp.eq.s32.totalorder %v968, 1
    %v970 = vsel %vm969, %v963, %v793
    %v971 = vsel %vm969, %v957, %v794
    %973 = vset.pattern.permute.xlu0 1
    %974 = vperm.xlu0 %973, %v937
    %v975 = vpop.permute.xlu0 %974
    %v977 = vmul.f32 %v963, %v975
    %979 = vrot.lane.b32.xlu0 %v977, 96
    %v980 = vpop.permute.xlu0 %979
    %982 = vst.msk [vmem:[#allocation3 + $0x20] sm:$0xff] %vm450, %v980
    %984 = vrot.lane.b32.xlu0 %v923, 64
    %v985 = vpop.permute.xlu0 %984
    %988 = vrot.lane.b32.xlu0 %v970, 96
    %v989 = vpop.permute.xlu0 %988
    %v991 = vsel %vm86, %v985, %v989
    %v993 = vsel %vm268, %v991, 0
    %995 = vmatprep.subr.mxu0 0.0
    %996 = vmatpush1.msra.mxu0 0.0
    %997 = vmatprep.subr.mxu0 0.0
    %998 = vmatpush1.msra.mxu0 0.0
    %999 = vmatprep.subr.mxu0 0.0
    %1000 = vmatpush1.msra.mxu0 0.0
    %1001 = vmatprep.subr.mxu0 0.0
    %1002 = vmatpush1.msra.mxu0 0.0
    %1003 = vmatprep.subr.mxu0 0.0
    %1004 = vmatpush1.msra.mxu0 0.0
    %1005 = vmatprep.subr.mxu0 0.0
    %1006 = vmatpush1.msra.mxu0 0.0
    %1007 = vmatprep.subr.mxu0 0.0
    %1008 = vmatpush1.msra.mxu0 0.0
    %1009 = vmatprep.subr.mxu0 0.0
    %1010 = vmatpush1.msra.mxu0 0.0
    %1011 = vmatprep.subr.mxu0 %v255
    %1012 = vmatpush1.msra.mxu0 %v254
    %1013 = vmatprep.subr.mxu0 %v253
    %1014 = vmatpush1.msra.mxu0 %v252
    %1015 = vmatprep.subr.mxu0 %v251
    %1016 = vmatpush1.msra.mxu0 %v250
    %1017 = vmatprep.subr.mxu0 %v249
    %1018 = vmatpush1.msra.mxu0 %v248
    %1019 = vmatprep.subr.mxu0 %v247
    %1020 = vmatpush1.msra.mxu0 %v246
    %1021 = vmatprep.subr.mxu0 %v245
    %1022 = vmatpush1.msra.mxu0 %v244
    %1023 = vmatprep.subr.mxu0 %v243
    %1024 = vmatpush1.msra.mxu0 %v242
    %1025 = vmatprep.subr.mxu0 %v241
    %1026 = vmatpush1.msra.mxu0 %v240
    %1027 = vmatprep.subr.mxu0 0.0
    %1028 = vmatpush2.msra.mxu0 0.0
    %1029 = vmatprep.subr.mxu0 0.0
    %1030 = vmatpush2.msra.mxu0 0.0
    %1031 = vmatprep.subr.mxu0 0.0
    %1032 = vmatpush2.msra.mxu0 0.0
    %1033 = vmatprep.subr.mxu0 0.0
    %1034 = vmatpush2.msra.mxu0 0.0
    %1035 = vmatprep.subr.mxu0 0.0
    %1036 = vmatpush2.msra.mxu0 0.0
    %1037 = vmatprep.subr.mxu0 0.0
    %1038 = vmatpush2.msra.mxu0 0.0
    %1039 = vmatprep.subr.mxu0 0.0
    %1040 = vmatpush2.msra.mxu0 0.0
    %1041 = vmatprep.subr.mxu0 0.0
    %1042 = vmatpush2.msra.mxu0 0.0
    %1043 = vmatprep.subr.mxu0 0.0
    %1044 = vmatpush2.msra.mxu0 0.0
    %1045 = vmatprep.subr.mxu0 0.0
    %1046 = vmatpush2.msra.mxu0 0.0
    %1047 = vmatprep.subr.mxu0 0.0
    %1048 = vmatpush2.msra.mxu0 0.0
    %1049 = vmatprep.subr.mxu0 0.0
    %1050 = vmatpush2.msra.mxu0 0.0
    %1051 = vmatprep.subr.mxu0 0.0
    %1052 = vmatpush2.msra.mxu0 0.0
    %1053 = vmatprep.subr.mxu0 0.0
    %1054 = vmatpush2.msra.mxu0 0.0
    %1055 = vmatprep.subr.mxu0 0.0
    %1056 = vmatpush2.msra.mxu0 0.0
    %1057 = vmatprep.subr.mxu0 0.0
    %1058 = vmatpush2.msra.mxu0 0.0
    %1059 = vmatprep.mubr.f32.mxu0 0.0
    %1060 = vmatmul.mubr.f32.gmra.mxu0 %v993
    %v1061 = vpop.f32.mrf.mxu0
    %v1062 = vadd.f32 0.0, %v1061
    %v1063 = vpop.f32.mrf.mxu0
    %v1064 = vadd.f32 0.0, %v1063
    %1065 = vdwg.mxu0
    %v1066 = vld [vmem:[%s936] sm:$0xff]
    %v1067 = vld [vmem:[#allocation2 + $0x40] sm:$0xff]
    %v1068 = vadd.f32 %v1067, %v1062
    %v1069 = vxor.u32 %v1068, 2147483648
    %v1070 = vmul.f32 %v1069, 1.442695
    %v1071 = vpow.pop %v1070
    %v1072 = vadd.f32 %v1071, 1.0
    %v1073 = vrcp.pop %v1072
    %v1074 = vmul.f32 1.0, %v1073
    %v1075 = vtanh.pop %v1068
    %v1076 = vmul.f32 %v1074, %v924
    %1078 = vrot.lane.b32.xlu0 %v1075, 32
    %v1079 = vpop.permute.xlu0 %1078
    %v1081 = vmul.f32 %v1074, %v1079
    %1083 = vrot.lane.b32.xlu0 %v1081, 32
    %v1084 = vpop.permute.xlu0 %1083
    %v1086 = vadd.f32 %v1076, %v1084
    %v1087 = vtanh.pop %v1086
    %1089 = vrot.lane.b32.xlu0 %v1087, 32
    %v1090 = vpop.permute.xlu0 %1089
    %v1092 = vmul.f32 %v1074, %v1090
    %vm1093 = vcmp.gt.f32.partialorder %v1066, 0.0
    %v1094 = vsel %vm1093, 1, 0
    %1095 = vset.pattern.permute.xlu0 0
    %1096 = vperm.xlu0 %1095, %v1094
    %v1097 = vpop.permute.xlu0 %1096
    %vm1098 = vcmp.eq.s32.totalorder %v1097, 1
    %v1099 = vsel %vm1098, %v1092, %v923
    %v1100 = vsel %vm1098, %v1086, %v924
    %1102 = vset.pattern.permute.xlu0 1
    %1103 = vperm.xlu0 %1102, %v1066
    %v1104 = vpop.permute.xlu0 %1103
    %v1106 = vmul.f32 %v1092, %v1104
    %1108 = vrot.lane.b32.xlu0 %v1106, 64
    %v1109 = vpop.permute.xlu0 %1108
    %1111 = vst.msk [vmem:[#allocation3 + $0x20] sm:$0xff] %vm86, %v1109
    %v1112 = vld [vmem:[%s889] sm:$0xff]
    %v1113 = vld [vmem:[#allocation2 + $0x38] sm:$0xff]
    %v1114 = vadd.f32 %v1113, %v1064
    %v1115 = vxor.u32 %v1114, 2147483648
    %v1116 = vmul.f32 %v1115, 1.442695
    %v1117 = vpow.pop %v1116
    %v1118 = vadd.f32 %v1117, 1.0
    %v1119 = vrcp.pop %v1118
    %v1120 = vmul.f32 1.0, %v1119
    %v1121 = vtanh.pop %v1114
    %v1122 = vmul.f32 %v1120, %v971
    %1124 = vrot.lane.b32.xlu0 %v1121, 32
    %v1125 = vpop.permute.xlu0 %1124
    %v1127 = vmul.f32 %v1120, %v1125
    %1129 = vrot.lane.b32.xlu0 %v1127, 32
    %v1130 = vpop.permute.xlu0 %1129
    %v1132 = vadd.f32 %v1122, %v1130
    %v1133 = vtanh.pop %v1132
    %1135 = vrot.lane.b32.xlu0 %v1133, 32
    %v1136 = vpop.permute.xlu0 %1135
    %v1138 = vmul.f32 %v1120, %v1136
    %vm1139 = vcmp.gt.f32.partialorder %v1112, 0.0
    %v1140 = vsel %vm1139, 1, 0
    %1141 = vset.pattern.permute.xlu0 0
    %1142 = vperm.xlu0 %1141, %v1140
    %v1143 = vpop.permute.xlu0 %1142
    %vm1144 = vcmp.eq.s32.totalorder %v1143, 1
    %v1145 = vsel %vm1144, %v1138, %v970
    %v1146 = vsel %vm1144, %v1132, %v971
    %1148 = vset.pattern.permute.xlu0 1
    %1149 = vperm.xlu0 %1148, %v1112
    %v1150 = vpop.permute.xlu0 %1149
    %v1152 = vmul.f32 %v1138, %v1150
    %1154 = vrot.lane.b32.xlu0 %v1152, 96
    %v1155 = vpop.permute.xlu0 %1154
    %1157 = vst.msk [vmem:[#allocation3 + $0x18] sm:$0xff] %vm450, %v1155
    %1159 = vrot.lane.b32.xlu0 %v1099, 64
    %v1160 = vpop.permute.xlu0 %1159
    %1163 = vrot.lane.b32.xlu0 %v1145, 96
    %v1164 = vpop.permute.xlu0 %1163
    %v1166 = vsel %vm86, %v1160, %v1164
    %v1168 = vsel %vm268, %v1166, 0
    %1170 = vmatprep.subr.mxu0 0.0
    %1171 = vmatpush1.msra.mxu0 0.0
    %1172 = vmatprep.subr.mxu0 0.0
    %1173 = vmatpush1.msra.mxu0 0.0
    %1174 = vmatprep.subr.mxu0 0.0
    %1175 = vmatpush1.msra.mxu0 0.0
    %1176 = vmatprep.subr.mxu0 0.0
    %1177 = vmatpush1.msra.mxu0 0.0
    %1178 = vmatprep.subr.mxu0 0.0
    %1179 = vmatpush1.msra.mxu0 0.0
    %1180 = vmatprep.subr.mxu0 0.0
    %1181 = vmatpush1.msra.mxu0 0.0
    %1182 = vmatprep.subr.mxu0 0.0
    %1183 = vmatpush1.msra.mxu0 0.0
    %1184 = vmatprep.subr.mxu0 0.0
    %1185 = vmatpush1.msra.mxu0 0.0
    %1186 = vmatprep.subr.mxu0 %v255
    %1187 = vmatpush1.msra.mxu0 %v254
    %1188 = vmatprep.subr.mxu0 %v253
    %1189 = vmatpush1.msra.mxu0 %v252
    %1190 = vmatprep.subr.mxu0 %v251
    %1191 = vmatpush1.msra.mxu0 %v250
    %1192 = vmatprep.subr.mxu0 %v249
    %1193 = vmatpush1.msra.mxu0 %v248
    %1194 = vmatprep.subr.mxu0 %v247
    %1195 = vmatpush1.msra.mxu0 %v246
    %1196 = vmatprep.subr.mxu0 %v245
    %1197 = vmatpush1.msra.mxu0 %v244
    %1198 = vmatprep.subr.mxu0 %v243
    %1199 = vmatpush1.msra.mxu0 %v242
    %1200 = vmatprep.subr.mxu0 %v241
    %1201 = vmatpush1.msra.mxu0 %v240
    %1202 = vmatprep.subr.mxu0 0.0
    %1203 = vmatpush2.msra.mxu0 0.0
    %1204 = vmatprep.subr.mxu0 0.0
    %1205 = vmatpush2.msra.mxu0 0.0
    %1206 = vmatprep.subr.mxu0 0.0
    %1207 = vmatpush2.msra.mxu0 0.0
    %1208 = vmatprep.subr.mxu0 0.0
    %1209 = vmatpush2.msra.mxu0 0.0
    %1210 = vmatprep.subr.mxu0 0.0
    %1211 = vmatpush2.msra.mxu0 0.0
    %1212 = vmatprep.subr.mxu0 0.0
    %1213 = vmatpush2.msra.mxu0 0.0
    %1214 = vmatprep.subr.mxu0 0.0
    %1215 = vmatpush2.msra.mxu0 0.0
    %1216 = vmatprep.subr.mxu0 0.0
    %1217 = vmatpush2.msra.mxu0 0.0
    %1218 = vmatprep.subr.mxu0 0.0
    %1219 = vmatpush2.msra.mxu0 0.0
    %1220 = vmatprep.subr.mxu0 0.0
    %1221 = vmatpush2.msra.mxu0 0.0
    %1222 = vmatprep.subr.mxu0 0.0
    %1223 = vmatpush2.msra.mxu0 0.0
    %1224 = vmatprep.subr.mxu0 0.0
    %1225 = vmatpush2.msra.mxu0 0.0
    %1226 = vmatprep.subr.mxu0 0.0
    %1227 = vmatpush2.msra.mxu0 0.0
    %1228 = vmatprep.subr.mxu0 0.0
    %1229 = vmatpush2.msra.mxu0 0.0
    %1230 = vmatprep.subr.mxu0 0.0
    %1231 = vmatpush2.msra.mxu0 0.0
    %1232 = vmatprep.subr.mxu0 0.0
    %1233 = vmatpush2.msra.mxu0 0.0
    %1234 = vmatprep.mubr.f32.mxu0 0.0
    %1235 = vmatmul.mubr.f32.gmra.mxu0 %v1168
    %v1236 = vpop.f32.mrf.mxu0
    %v1237 = vadd.f32 0.0, %v1236
    %v1238 = vpop.f32.mrf.mxu0
    %v1239 = vadd.f32 0.0, %v1238
    %1240 = vdwg.mxu0
    %v1241 = vld [vmem:[%s759] sm:$0xff]
    %v1242 = vld [vmem:[#allocation2 + $0x50] sm:$0xff]
    %v1243 = vadd.f32 %v1242, %v1237
    %v1244 = vxor.u32 %v1243, 2147483648
    %v1245 = vmul.f32 %v1244, 1.442695
    %v1246 = vpow.pop %v1245
    %v1247 = vadd.f32 %v1246, 1.0
    %v1248 = vrcp.pop %v1247
    %v1249 = vmul.f32 1.0, %v1248
    %v1250 = vtanh.pop %v1243
    %v1251 = vmul.f32 %v1249, %v1100
    %1253 = vrot.lane.b32.xlu0 %v1250, 32
    %v1254 = vpop.permute.xlu0 %1253
    %v1256 = vmul.f32 %v1249, %v1254
    %1258 = vrot.lane.b32.xlu0 %v1256, 32
    %v1259 = vpop.permute.xlu0 %1258
    %v1261 = vadd.f32 %v1251, %v1259
    %v1262 = vtanh.pop %v1261
    %1264 = vrot.lane.b32.xlu0 %v1262, 32
    %v1265 = vpop.permute.xlu0 %1264
    %v1267 = vmul.f32 %v1249, %v1265
    %vm1268 = vcmp.gt.f32.partialorder %v1241, 0.0
    %v1269 = vsel %vm1268, 1, 0
    %1270 = vset.pattern.permute.xlu0 0
    %1271 = vperm.xlu0 %1270, %v1269
    %v1272 = vpop.permute.xlu0 %1271
    %vm1273 = vcmp.eq.s32.totalorder %v1272, 1
    %v1274 = vsel %vm1273, %v1267, %v1099
    %v1275 = vsel %vm1273, %v1261, %v1100
    %1277 = vset.pattern.permute.xlu0 1
    %1278 = vperm.xlu0 %1277, %v1241
    %v1279 = vpop.permute.xlu0 %1278
    %v1281 = vmul.f32 %v1267, %v1279
    %1283 = vrot.lane.b32.xlu0 %v1281, 64
    %v1284 = vpop.permute.xlu0 %1283
    %1286 = vst.msk [vmem:[#allocation3 + $0x28] sm:$0xff] %vm86, %v1284
    %v1287 = vld [vmem:[%s712] sm:$0xff]
    %v1288 = vld [vmem:[#allocation2 + $0x28] sm:$0xff]
    %v1289 = vadd.f32 %v1288, %v1239
    %v1290 = vxor.u32 %v1289, 2147483648
    %v1291 = vmul.f32 %v1290, 1.442695
    %v1292 = vpow.pop %v1291
    %v1293 = vadd.f32 %v1292, 1.0
    %v1294 = vrcp.pop %v1293
    %v1295 = vmul.f32 1.0, %v1294
    %v1296 = vtanh.pop %v1289
    %v1297 = vmul.f32 %v1295, %v1146
    %1299 = vrot.lane.b32.xlu0 %v1296, 32
    %v1300 = vpop.permute.xlu0 %1299
    %v1302 = vmul.f32 %v1295, %v1300
    %1304 = vrot.lane.b32.xlu0 %v1302, 32
    %v1305 = vpop.permute.xlu0 %1304
    %v1307 = vadd.f32 %v1297, %v1305
    %v1308 = vtanh.pop %v1307
    %1310 = vrot.lane.b32.xlu0 %v1308, 32
    %v1311 = vpop.permute.xlu0 %1310
    %v1313 = vmul.f32 %v1295, %v1311
    %vm1314 = vcmp.gt.f32.partialorder %v1287, 0.0
    %v1315 = vsel %vm1314, 1, 0
    %1316 = vset.pattern.permute.xlu0 0
    %1317 = vperm.xlu0 %1316, %v1315
    %v1318 = vpop.permute.xlu0 %1317
    %vm1319 = vcmp.eq.s32.totalorder %v1318, 1
    %v1320 = vsel %vm1319, %v1313, %v1145
    %v1321 = vsel %vm1319, %v1307, %v1146
    %1323 = vset.pattern.permute.xlu0 1
    %1324 = vperm.xlu0 %1323, %v1287
    %v1325 = vpop.permute.xlu0 %1324
    %v1327 = vmul.f32 %v1313, %v1325
    %1329 = vrot.lane.b32.xlu0 %v1327, 96
    %v1330 = vpop.permute.xlu0 %1329
    %1332 = vst.msk [vmem:[#allocation3 + $0x10] sm:$0xff] %vm450, %v1330
    %1334 = vrot.lane.b32.xlu0 %v1274, 64
    %v1335 = vpop.permute.xlu0 %1334
    %1338 = vrot.lane.b32.xlu0 %v1320, 96
    %v1339 = vpop.permute.xlu0 %1338
    %v1341 = vsel %vm86, %v1335, %v1339
    %v1343 = vsel %vm268, %v1341, 0
    %1345 = vmatprep.subr.mxu0 0.0
    %1346 = vmatpush1.msra.mxu0 0.0
    %1347 = vmatprep.subr.mxu0 0.0
    %1348 = vmatpush1.msra.mxu0 0.0
    %1349 = vmatprep.subr.mxu0 0.0
    %1350 = vmatpush1.msra.mxu0 0.0
    %1351 = vmatprep.subr.mxu0 0.0
    %1352 = vmatpush1.msra.mxu0 0.0
    %1353 = vmatprep.subr.mxu0 0.0
    %1354 = vmatpush1.msra.mxu0 0.0
    %1355 = vmatprep.subr.mxu0 0.0
    %1356 = vmatpush1.msra.mxu0 0.0
    %1357 = vmatprep.subr.mxu0 0.0
    %1358 = vmatpush1.msra.mxu0 0.0
    %1359 = vmatprep.subr.mxu0 0.0
    %1360 = vmatpush1.msra.mxu0 0.0
    %1361 = vmatprep.subr.mxu0 %v255
    %1362 = vmatpush1.msra.mxu0 %v254
    %1363 = vmatprep.subr.mxu0 %v253
    %1364 = vmatpush1.msra.mxu0 %v252
    %1365 = vmatprep.subr.mxu0 %v251
    %1366 = vmatpush1.msra.mxu0 %v250
    %1367 = vmatprep.subr.mxu0 %v249
    %1368 = vmatpush1.msra.mxu0 %v248
    %1369 = vmatprep.subr.mxu0 %v247
    %1370 = vmatpush1.msra.mxu0 %v246
    %1371 = vmatprep.subr.mxu0 %v245
    %1372 = vmatpush1.msra.mxu0 %v244
    %1373 = vmatprep.subr.mxu0 %v243
    %1374 = vmatpush1.msra.mxu0 %v242
    %1375 = vmatprep.subr.mxu0 %v241
    %1376 = vmatpush1.msra.mxu0 %v240
    %1377 = vmatprep.subr.mxu0 0.0
    %1378 = vmatpush2.msra.mxu0 0.0
    %1379 = vmatprep.subr.mxu0 0.0
    %1380 = vmatpush2.msra.mxu0 0.0
    %1381 = vmatprep.subr.mxu0 0.0
    %1382 = vmatpush2.msra.mxu0 0.0
    %1383 = vmatprep.subr.mxu0 0.0
    %1384 = vmatpush2.msra.mxu0 0.0
    %1385 = vmatprep.subr.mxu0 0.0
    %1386 = vmatpush2.msra.mxu0 0.0
    %1387 = vmatprep.subr.mxu0 0.0
    %1388 = vmatpush2.msra.mxu0 0.0
    %1389 = vmatprep.subr.mxu0 0.0
    %1390 = vmatpush2.msra.mxu0 0.0
    %1391 = vmatprep.subr.mxu0 0.0
    %1392 = vmatpush2.msra.mxu0 0.0
    %1393 = vmatprep.subr.mxu0 0.0
    %1394 = vmatpush2.msra.mxu0 0.0
    %1395 = vmatprep.subr.mxu0 0.0
    %1396 = vmatpush2.msra.mxu0 0.0
    %1397 = vmatprep.subr.mxu0 0.0
    %1398 = vmatpush2.msra.mxu0 0.0
    %1399 = vmatprep.subr.mxu0 0.0
    %1400 = vmatpush2.msra.mxu0 0.0
    %1401 = vmatprep.subr.mxu0 0.0
    %1402 = vmatpush2.msra.mxu0 0.0
    %1403 = vmatprep.subr.mxu0 0.0
    %1404 = vmatpush2.msra.mxu0 0.0
    %1405 = vmatprep.subr.mxu0 0.0
    %1406 = vmatpush2.msra.mxu0 0.0
    %1407 = vmatprep.subr.mxu0 0.0
    %1408 = vmatpush2.msra.mxu0 0.0
    %1409 = vmatprep.mubr.f32.mxu0 0.0
    %1410 = vmatmul.mubr.f32.gmra.mxu0 %v1343
    %v1411 = vpop.f32.mrf.mxu0
    %v1412 = vadd.f32 0.0, %v1411
    %v1413 = vpop.f32.mrf.mxu0
    %v1414 = vadd.f32 0.0, %v1413
    %1415 = vdwg.mxu0
    %v1416 = vld [vmem:[%s582] sm:$0xff]
    %v1417 = vld [vmem:[#allocation2 + $0x60] sm:$0xff]
    %v1418 = vadd.f32 %v1417, %v1412
    %v1419 = vxor.u32 %v1418, 2147483648
    %v1420 = vmul.f32 %v1419, 1.442695
    %v1421 = vpow.pop %v1420
    %v1422 = vadd.f32 %v1421, 1.0
    %v1423 = vrcp.pop %v1422
    %v1424 = vmul.f32 1.0, %v1423
    %v1425 = vtanh.pop %v1418
    %v1426 = vmul.f32 %v1424, %v1275
    %1428 = vrot.lane.b32.xlu0 %v1425, 32
    %v1429 = vpop.permute.xlu0 %1428
    %v1431 = vmul.f32 %v1424, %v1429
    %1433 = vrot.lane.b32.xlu0 %v1431, 32
    %v1434 = vpop.permute.xlu0 %1433
    %v1436 = vadd.f32 %v1426, %v1434
    %v1437 = vtanh.pop %v1436
    %1439 = vrot.lane.b32.xlu0 %v1437, 32
    %v1440 = vpop.permute.xlu0 %1439
    %v1442 = vmul.f32 %v1424, %v1440
    %vm1443 = vcmp.gt.f32.partialorder %v1416, 0.0
    %v1444 = vsel %vm1443, 1, 0
    %1445 = vset.pattern.permute.xlu0 0
    %1446 = vperm.xlu0 %1445, %v1444
    %v1447 = vpop.permute.xlu0 %1446
    %vm1448 = vcmp.eq.s32.totalorder %v1447, 1
    %v1449 = vsel %vm1448, %v1442, %v1274
    %v1450 = vsel %vm1448, %v1436, %v1275
    %1452 = vset.pattern.permute.xlu0 1
    %1453 = vperm.xlu0 %1452, %v1416
    %v1454 = vpop.permute.xlu0 %1453
    %v1456 = vmul.f32 %v1442, %v1454
    %1458 = vrot.lane.b32.xlu0 %v1456, 64
    %v1459 = vpop.permute.xlu0 %1458
    %1461 = vst.msk [vmem:[#allocation3 + $0x30] sm:$0xff] %vm86, %v1459
    %v1462 = vld [vmem:[%s535] sm:$0xff]
    %v1463 = vld [vmem:[#allocation2 + $0x18] sm:$0xff]
    %v1464 = vadd.f32 %v1463, %v1414
    %v1465 = vxor.u32 %v1464, 2147483648
    %v1466 = vmul.f32 %v1465, 1.442695
    %v1467 = vpow.pop %v1466
    %v1468 = vadd.f32 %v1467, 1.0
    %v1469 = vrcp.pop %v1468
    %v1470 = vmul.f32 1.0, %v1469
    %v1471 = vtanh.pop %v1464
    %v1472 = vmul.f32 %v1470, %v1321
    %1474 = vrot.lane.b32.xlu0 %v1471, 32
    %v1475 = vpop.permute.xlu0 %1474
    %v1477 = vmul.f32 %v1470, %v1475
    %1479 = vrot.lane.b32.xlu0 %v1477, 32
    %v1480 = vpop.permute.xlu0 %1479
    %v1482 = vadd.f32 %v1472, %v1480
    %v1483 = vtanh.pop %v1482
    %1485 = vrot.lane.b32.xlu0 %v1483, 32
    %v1486 = vpop.permute.xlu0 %1485
    %v1488 = vmul.f32 %v1470, %v1486
    %vm1489 = vcmp.gt.f32.partialorder %v1462, 0.0
    %v1490 = vsel %vm1489, 1, 0
    %1491 = vset.pattern.permute.xlu0 0
    %1492 = vperm.xlu0 %1491, %v1490
    %v1493 = vpop.permute.xlu0 %1492
    %vm1494 = vcmp.eq.s32.totalorder %v1493, 1
    %v1495 = vsel %vm1494, %v1488, %v1320
    %v1496 = vsel %vm1494, %v1482, %v1321
    %1498 = vset.pattern.permute.xlu0 1
    %1499 = vperm.xlu0 %1498, %v1462
    %v1500 = vpop.permute.xlu0 %1499
    %v1502 = vmul.f32 %v1488, %v1500
    %1504 = vrot.lane.b32.xlu0 %v1502, 96
    %v1505 = vpop.permute.xlu0 %1504
    %1507 = vst.msk [vmem:[#allocation3 + $0x8] sm:$0xff] %vm450, %v1505
    %1509 = vrot.lane.b32.xlu0 %v1449, 64
    %v1510 = vpop.permute.xlu0 %1509
    %1513 = vrot.lane.b32.xlu0 %v1495, 96
    %v1514 = vpop.permute.xlu0 %1513
    %v1516 = vsel %vm86, %v1510, %v1514
    %v1518 = vsel %vm268, %v1516, 0
    %1520 = vmatprep.subr.mxu0 0.0
    %1521 = vmatpush1.msra.mxu0 0.0
    %1522 = vmatprep.subr.mxu0 0.0
    %1523 = vmatpush1.msra.mxu0 0.0
    %1524 = vmatprep.subr.mxu0 0.0
    %1525 = vmatpush1.msra.mxu0 0.0
    %1526 = vmatprep.subr.mxu0 0.0
    %1527 = vmatpush1.msra.mxu0 0.0
    %1528 = vmatprep.subr.mxu0 0.0
    %1529 = vmatpush1.msra.mxu0 0.0
    %1530 = vmatprep.subr.mxu0 0.0
    %1531 = vmatpush1.msra.mxu0 0.0
    %1532 = vmatprep.subr.mxu0 0.0
    %1533 = vmatpush1.msra.mxu0 0.0
    %1534 = vmatprep.subr.mxu0 0.0
    %1535 = vmatpush1.msra.mxu0 0.0
    %1536 = vmatprep.subr.mxu0 %v255
    %1537 = vmatpush1.msra.mxu0 %v254
    %1538 = vmatprep.subr.mxu0 %v253
    %1539 = vmatpush1.msra.mxu0 %v252
    %1540 = vmatprep.subr.mxu0 %v251
    %1541 = vmatpush1.msra.mxu0 %v250
    %1542 = vmatprep.subr.mxu0 %v249
    %1543 = vmatpush1.msra.mxu0 %v248
    %1544 = vmatprep.subr.mxu0 %v247
    %1545 = vmatpush1.msra.mxu0 %v246
    %1546 = vmatprep.subr.mxu0 %v245
    %1547 = vmatpush1.msra.mxu0 %v244
    %1548 = vmatprep.subr.mxu0 %v243
    %1549 = vmatpush1.msra.mxu0 %v242
    %1550 = vmatprep.subr.mxu0 %v241
    %1551 = vmatpush1.msra.mxu0 %v240
    %1552 = vmatprep.subr.mxu0 0.0
    %1553 = vmatpush2.msra.mxu0 0.0
    %1554 = vmatprep.subr.mxu0 0.0
    %1555 = vmatpush2.msra.mxu0 0.0
    %1556 = vmatprep.subr.mxu0 0.0
    %1557 = vmatpush2.msra.mxu0 0.0
    %1558 = vmatprep.subr.mxu0 0.0
    %1559 = vmatpush2.msra.mxu0 0.0
    %1560 = vmatprep.subr.mxu0 0.0
    %1561 = vmatpush2.msra.mxu0 0.0
    %1562 = vmatprep.subr.mxu0 0.0
    %1563 = vmatpush2.msra.mxu0 0.0
    %1564 = vmatprep.subr.mxu0 0.0
    %1565 = vmatpush2.msra.mxu0 0.0
    %1566 = vmatprep.subr.mxu0 0.0
    %1567 = vmatpush2.msra.mxu0 0.0
    %1568 = vmatprep.subr.mxu0 0.0
    %1569 = vmatpush2.msra.mxu0 0.0
    %1570 = vmatprep.subr.mxu0 0.0
    %1571 = vmatpush2.msra.mxu0 0.0
    %1572 = vmatprep.subr.mxu0 0.0
    %1573 = vmatpush2.msra.mxu0 0.0
    %1574 = vmatprep.subr.mxu0 0.0
    %1575 = vmatpush2.msra.mxu0 0.0
    %1576 = vmatprep.subr.mxu0 0.0
    %1577 = vmatpush2.msra.mxu0 0.0
    %1578 = vmatprep.subr.mxu0 0.0
    %1579 = vmatpush2.msra.mxu0 0.0
    %1580 = vmatprep.subr.mxu0 0.0
    %1581 = vmatpush2.msra.mxu0 0.0
    %1582 = vmatprep.subr.mxu0 0.0
    %1583 = vmatpush2.msra.mxu0 0.0
    %1584 = vmatprep.mubr.f32.mxu0 0.0
    %1585 = vmatmul.mubr.f32.gmra.mxu0 %v1518
    %v1586 = vpop.f32.mrf.mxu0
    %v1587 = vadd.f32 0.0, %v1586
    %v1588 = vpop.f32.mrf.mxu0
    %v1589 = vadd.f32 0.0, %v1588
    %1590 = vdwg.mxu0
    %v1591 = vld [vmem:[%s397] sm:$0xff]
    %v1592 = vld [vmem:[#allocation2 + $0x70] sm:$0xff]
    %v1593 = vadd.f32 %v1592, %v1587
    %v1594 = vxor.u32 %v1593, 2147483648
    %v1595 = vmul.f32 %v1594, 1.442695
    %v1596 = vpow.pop %v1595
    %v1597 = vadd.f32 %v1596, 1.0
    %v1598 = vrcp.pop %v1597
    %v1599 = vmul.f32 1.0, %v1598
    %v1600 = vtanh.pop %v1593
    %v1601 = vmul.f32 %v1599, %v1450
    %1603 = vrot.lane.b32.xlu0 %v1600, 32
    %v1604 = vpop.permute.xlu0 %1603
    %v1606 = vmul.f32 %v1599, %v1604
    %1608 = vrot.lane.b32.xlu0 %v1606, 32
    %v1609 = vpop.permute.xlu0 %1608
    %v1611 = vadd.f32 %v1601, %v1609
    %v1612 = vtanh.pop %v1611
    %1614 = vrot.lane.b32.xlu0 %v1612, 32
    %v1615 = vpop.permute.xlu0 %1614
    %v1617 = vmul.f32 %v1599, %v1615
    %1619 = vset.pattern.permute.xlu0 1
    %1620 = vperm.xlu0 %1619, %v1591
    %v1621 = vpop.permute.xlu0 %1620
    %v1623 = vmul.f32 %v1617, %v1621
    %1625 = vrot.lane.b32.xlu0 %v1623, 64
    %v1626 = vpop.permute.xlu0 %1625
    %1628 = vst.msk [vmem:[#allocation3 + $0x38] sm:$0xff] %vm86, %v1626
    %v1629 = vld [vmem:[%s1] sm:$0xff]
    %v1630 = vld [vmem:[#allocation2 + $0x8] sm:$0xff]
    %v1631 = vadd.f32 %v1630, %v1589
    %v1632 = vxor.u32 %v1631, 2147483648
    %v1633 = vmul.f32 %v1632, 1.442695
    %v1634 = vpow.pop %v1633
    %v1635 = vadd.f32 %v1634, 1.0
    %v1636 = vrcp.pop %v1635
    %v1637 = vmul.f32 1.0, %v1636
    %v1638 = vtanh.pop %v1631
    %v1639 = vmul.f32 %v1637, %v1496
    %1641 = vrot.lane.b32.xlu0 %v1638, 32
    %v1642 = vpop.permute.xlu0 %1641
    %v1644 = vmul.f32 %v1637, %v1642
    %1646 = vrot.lane.b32.xlu0 %v1644, 32
    %v1647 = vpop.permute.xlu0 %1646
    %v1649 = vadd.f32 %v1639, %v1647
    %v1650 = vtanh.pop %v1649
    %1652 = vrot.lane.b32.xlu0 %v1650, 32
    %v1653 = vpop.permute.xlu0 %1652
    %v1655 = vmul.f32 %v1637, %v1653
    %1657 = vset.pattern.permute.xlu0 1
    %1658 = vperm.xlu0 %1657, %v1629
    %v1659 = vpop.permute.xlu0 %1658
    %v1661 = vmul.f32 %v1655, %v1659
    %1663 = vrot.lane.b32.xlu0 %v1661, 96
    %v1664 = vpop.permute.xlu0 %1663
    %1666 = vst.msk [vmem:[#allocation3] sm:$0xff] %vm450, %v1664
    %v1667 = vld [vmem:[#allocation3] sm:$0xff]
    %v1668 = vld [vmem:[#allocation3 + $0x8] sm:$0xff]
    %v1669 = vld [vmem:[#allocation3 + $0x10] sm:$0xff]
    %v1670 = vld [vmem:[#allocation3 + $0x18] sm:$0xff]
    %v1671 = vld [vmem:[#allocation3 + $0x20] sm:$0xff]
    %v1672 = vld [vmem:[#allocation3 + $0x28] sm:$0xff]
    %v1673 = vld [vmem:[#allocation3 + $0x30] sm:$0xff]
    %v1674 = vld [vmem:[#allocation3 + $0x38] sm:$0xff]
    %v1675 = vld [vmem:[#allocation7] sm:$0xff]
    %v1676 = vld [vmem:[#allocation7 + $0x8] sm:$0xff]
    %v1677 = vld [vmem:[#allocation7 + $0x10] sm:$0xff]
    %v1678 = vld [vmem:[#allocation7 + $0x18] sm:$0xff]
    %v1679 = vld [vmem:[#allocation7 + $0x20] sm:$0xff]
    %v1680 = vld [vmem:[#allocation7 + $0x28] sm:$0xff]
    %v1681 = vld [vmem:[#allocation7 + $0x30] sm:$0xff]
    %v1682 = vld [vmem:[#allocation7 + $0x38] sm:$0xff]
    %v1683 = vld [vmem:[%s7] sm:$0x1]
    %v1685 = vlaneseq
    %v1686 = vshrl.u32 %v1685, 7
    %v1687 = vsub.s32 0, %v1686
    %v1688 = vrot.slane %v1683, %v1687
    %v1691 = vsel %vm268, %v1667, 0
    %v1694 = vsel %vm268, %v1668, 0
    %v1697 = vsel %vm268, %v1669, 0
    %v1700 = vsel %vm268, %v1670, 0
    %v1703 = vsel %vm268, %v1671, 0
    %v1706 = vsel %vm268, %v1672, 0
    %v1709 = vsel %vm268, %v1673, 0
    %v1712 = vsel %vm268, %v1674, 0
    %1714 = vmatprep.subr.mxu0 0.0
    %1715 = vmatpush1.msra.mxu0 0.0
    %1716 = vmatprep.subr.mxu0 0.0
    %1717 = vmatpush1.msra.mxu0 0.0
    %1718 = vmatprep.subr.mxu0 0.0
    %1719 = vmatpush1.msra.mxu0 0.0
    %1720 = vmatprep.subr.mxu0 0.0
    %1721 = vmatpush1.msra.mxu0 0.0
    %1722 = vmatprep.subr.mxu0 0.0
    %1723 = vmatpush1.msra.mxu0 0.0
    %1724 = vmatprep.subr.mxu0 0.0
    %1725 = vmatpush1.msra.mxu0 0.0
    %1726 = vmatprep.subr.mxu0 0.0
    %1727 = vmatpush1.msra.mxu0 0.0
    %1728 = vmatprep.subr.mxu0 0.0
    %1729 = vmatpush1.msra.mxu0 0.0
    %1730 = vmatprep.subr.mxu0 0.0
    %1731 = vmatpush1.msra.mxu0 %v1682
    %1732 = vmatprep.subr.mxu0 0.0
    %1733 = vmatpush1.msra.mxu0 %v1681
    %1734 = vmatprep.subr.mxu0 0.0
    %1735 = vmatpush1.msra.mxu0 %v1680
    %1736 = vmatprep.subr.mxu0 0.0
    %1737 = vmatpush1.msra.mxu0 %v1679
    %1738 = vmatprep.subr.mxu0 0.0
    %1739 = vmatpush1.msra.mxu0 %v1678
    %1740 = vmatprep.subr.mxu0 0.0
    %1741 = vmatpush1.msra.mxu0 %v1677
    %1742 = vmatprep.subr.mxu0 0.0
    %1743 = vmatpush1.msra.mxu0 %v1676
    %1744 = vmatprep.subr.mxu0 0.0
    %1745 = vmatpush1.msra.mxu0 %v1675
    %1746 = vmatprep.subr.mxu0 0.0
    %1747 = vmatpush2.msra.mxu0 0.0
    %1748 = vmatprep.subr.mxu0 0.0
    %1749 = vmatpush2.msra.mxu0 0.0
    %1750 = vmatprep.subr.mxu0 0.0
    %1751 = vmatpush2.msra.mxu0 0.0
    %1752 = vmatprep.subr.mxu0 0.0
    %1753 = vmatpush2.msra.mxu0 0.0
    %1754 = vmatprep.subr.mxu0 0.0
    %1755 = vmatpush2.msra.mxu0 0.0
    %1756 = vmatprep.subr.mxu0 0.0
    %1757 = vmatpush2.msra.mxu0 0.0
    %1758 = vmatprep.subr.mxu0 0.0
    %1759 = vmatpush2.msra.mxu0 0.0
    %1760 = vmatprep.subr.mxu0 0.0
    %1761 = vmatpush2.msra.mxu0 0.0
    %1762 = vmatprep.subr.mxu0 0.0
    %1763 = vmatpush2.msra.mxu0 0.0
    %1764 = vmatprep.subr.mxu0 0.0
    %1765 = vmatpush2.msra.mxu0 0.0
    %1766 = vmatprep.subr.mxu0 0.0
    %1767 = vmatpush2.msra.mxu0 0.0
    %1768 = vmatprep.subr.mxu0 0.0
    %1769 = vmatpush2.msra.mxu0 0.0
    %1770 = vmatprep.subr.mxu0 0.0
    %1771 = vmatpush2.msra.mxu0 0.0
    %1772 = vmatprep.subr.mxu0 0.0
    %1773 = vmatpush2.msra.mxu0 0.0
    %1774 = vmatprep.subr.mxu0 0.0
    %1775 = vmatpush2.msra.mxu0 0.0
    %1776 = vmatprep.subr.mxu0 0.0
    %1777 = vmatpush2.msra.mxu0 0.0
    %1778 = vmatprep.mubr.f32.mxu0 0.0
    %1779 = vmatmul.mubr.f32.gmra.mxu0 %v1691
    %v1780 = vpop.f32.mrf.mxu0
    %v1781 = vadd.f32 %v1688, %v1780
    %v1782 = vpop.f32.mrf.mxu0
    %1783 = vmatprep.mubr.f32.mxu0 0.0
    %1784 = vmatmul.mubr.f32.gmra.mxu0 %v1694
    %v1785 = vpop.f32.mrf.mxu0
    %v1786 = vadd.f32 %v1688, %v1785
    %v1787 = vpop.f32.mrf.mxu0
    %1788 = vmatprep.mubr.f32.mxu0 0.0
    %1789 = vmatmul.mubr.f32.gmra.mxu0 %v1697
    %v1790 = vpop.f32.mrf.mxu0
    %v1791 = vadd.f32 %v1688, %v1790
    %v1792 = vpop.f32.mrf.mxu0
    %1793 = vmatprep.mubr.f32.mxu0 0.0
    %1794 = vmatmul.mubr.f32.gmra.mxu0 %v1700
    %v1795 = vpop.f32.mrf.mxu0
    %v1796 = vadd.f32 %v1688, %v1795
    %v1797 = vpop.f32.mrf.mxu0
    %1798 = vmatprep.mubr.f32.mxu0 0.0
    %1799 = vmatmul.mubr.f32.gmra.mxu0 %v1703
    %v1800 = vpop.f32.mrf.mxu0
    %v1801 = vadd.f32 %v1688, %v1800
    %v1802 = vpop.f32.mrf.mxu0
    %1803 = vmatprep.mubr.f32.mxu0 0.0
    %1804 = vmatmul.mubr.f32.gmra.mxu0 %v1706
    %v1805 = vpop.f32.mrf.mxu0
    %v1806 = vadd.f32 %v1688, %v1805
    %v1807 = vpop.f32.mrf.mxu0
    %1808 = vmatprep.mubr.f32.mxu0 0.0
    %1809 = vmatmul.mubr.f32.gmra.mxu0 %v1709
    %v1810 = vpop.f32.mrf.mxu0
    %v1811 = vadd.f32 %v1688, %v1810
    %v1812 = vpop.f32.mrf.mxu0
    %1813 = vmatprep.mubr.f32.mxu0 0.0
    %1814 = vmatmul.mubr.f32.gmra.mxu0 %v1712
    %v1815 = vpop.f32.mrf.mxu0
    %v1816 = vadd.f32 %v1688, %v1815
    %v1817 = vpop.f32.mrf.mxu0
    %1818 = vdwg.mxu0
    %1819 = vst [vmem:[#allocation9] sm:$0xff] %v1781
    %1820 = vst [vmem:[#allocation9 + $0x8] sm:$0xff] %v1786
    %1821 = vst [vmem:[#allocation9 + $0x10] sm:$0xff] %v1791
    %1822 = vst [vmem:[#allocation9 + $0x18] sm:$0xff] %v1796
    %1823 = vst [vmem:[#allocation9 + $0x20] sm:$0xff] %v1801
    %1824 = vst [vmem:[#allocation9 + $0x28] sm:$0xff] %v1806
    %1825 = vst [vmem:[#allocation9 + $0x30] sm:$0xff] %v1811
    %1826 = vst [vmem:[#allocation9 + $0x38] sm:$0xff] %v1816
    // Predicated region
    $region42: #{tpu_custom_call.1} parent=1 // pred_check
      _
    $region43: #{tpu_custom_call.1} parent=1 // pred_check_branch
      %1828 = sbr.rel (0) target = $region45
    $region44: #{tpu_custom_call.1} parent=1 // pred_region
      %s1830 = ssub.s32 1024, 1024
      %1831 = vsyncadd [#allocation6], %s1830
      %s1832 = sshll.u32 [#allocation9], 4
      %s1833 = int_to_ptr.vmem [resolvable:$true] %s1832
      %1838 = dma.vmem_to_hbm [thread:$0]  %s1833, 1024, %s8, [#allocation6], 128, 128, 8
    $region45: #{tpu_custom_call.1} parent=1 // pred_fallthru
      _
    // Predicated region
    $region46: #{tpu_custom_call.1} parent=1 // pred_check
      _
    $region47: #{tpu_custom_call.1} parent=1 // pred_check_branch
      %1840 = sbr.rel (0) target = $region49
    $region48: #{tpu_custom_call.1} parent=1 // pred_region
      %1841 = dma.done [#allocation6], 1024
    $region49: #{tpu_custom_call.1} parent=1 // pred_fallthru
      _
    %1842 = vsyncpa [#allocation5], 1
    %1843 = vsyncpa [#allocation8], 1
    %1844 = vsyncpa [#allocation6], 1

</llo_original>
